<compile_context>
chip_gen: v7x
topology: tpu7x:2x2x1
jax: 0.10.0
libtpu: 0.0.40
codegen_flags: <defaults>
</compile_context>

<pallas_src>
import functools
import math

import jax
import jax.numpy as jnp
from jax.experimental import pallas as pl
from jax.experimental.pallas import tpu as pltpu


def _sam_kernel(
    h_ref, enc_ref,
    wah_ref, wae_ref, ba_ref,             # TreeAttention.attn weight split + bias
    ws_ref,                               # TreeAttention.score weight as a [1, Dh] row
    we1_ref, be1_ref, we2_ref, be2_ref,   # encoder_linear1 / encoder_linear2
    wd1_ref, bd1_ref, wd2_ref, bd2_ref,   # decoder_linear1 / decoder_linear2
    enc_out_ref, dec_out_ref,
    hproj_ref, acc_ref, m_ref, l_ref,
    *, seq_len, tile_s, ragged,
):
    step = pl.program_id(0)

    @pl.when(step == 0)
    def _init():
        h = h_ref[...].astype(jnp.float32)
        # Decoder-hidden contribution to the attention energy, computed once
        # (replaces the per-row concat + full-width matmul of the reference).
        hproj_ref[...] = (
            jnp.dot(h, wah_ref[...], preferred_element_type=jnp.float32)
            + ba_ref[...]
        )
        acc_ref[...] = jnp.zeros(acc_ref.shape, acc_ref.dtype)
        m_ref[...] = jnp.full(m_ref.shape, -jnp.inf, m_ref.dtype)
        l_ref[...] = jnp.zeros(l_ref.shape, l_ref.dtype)

        # The decoder branch depends only on decoder_hidden: run it here so it
        # overlaps the first encoder-tile DMA instead of extending the serial
        # tail after the reduction.
        d1 = jnp.tanh(
            jnp.dot(h, wd1_ref[...], preferred_element_type=jnp.float32) + bd1_ref[...]
        )
        d2 = jnp.dot(d1, wd2_ref[...], preferred_element_type=jnp.float32) + bd2_ref[...]
        dec_out_ref[...] = d2.astype(dec_out_ref.dtype)

    # ---- attention energies for this sequence tile --------------------------
    enc = enc_ref[...].astype(jnp.float32)                          # [TS, E]
    feat = jnp.tanh(
        jnp.dot(enc, wae_ref[...], preferred_element_type=jnp.float32)
        + hproj_ref[...]
    )                                                               # [TS, Dh]
    # Score projection (Dh -> 1) as a VPU multiply + lane reduction; the score
    # bias is dropped because it cancels in the softmax.
    s = jnp.sum(feat * ws_ref[...], axis=1, keepdims=True)          # [TS, 1]

    if ragged:  # compile-time: only emitted when S % tile_s != 0
        row = step * tile_s + jax.lax.broadcasted_iota(jnp.int32, (tile_s, 1), 0)
        valid = row < seq_len
        s = jnp.where(valid, s, -1e30)
        enc = jnp.where(valid, enc, 0.0)   # stale VMEM rows must not be NaN/Inf

    # ---- online softmax + context accumulation ------------------------------
    m_prev = m_ref[...]                                             # [1, 1]
    m_new = jnp.maximum(m_prev, jnp.max(s, axis=0, keepdims=True))
    alpha = jnp.exp(m_prev - m_new)
    p = jnp.exp(s - m_new)                                          # [TS, 1]
    l_ref[...] = alpha * l_ref[...] + jnp.sum(p, axis=0, keepdims=True)
    acc_ref[...] = alpha * acc_ref[...] + jnp.sum(p * enc, axis=0, keepdims=True)
    m_ref[...] = m_new

    # ---- finalize: context + encoder-side MLP head ---------------------------
    @pl.when(step == pl.num_programs(0) - 1)
    def _finalize():
        ctx = acc_ref[...] / l_ref[...]                             # [1, E]
        e1 = jnp.tanh(
            jnp.dot(ctx, we1_ref[...], preferred_element_type=jnp.float32) + be1_ref[...]
        )
        e2 = jnp.dot(e1, we2_ref[...], preferred_element_type=jnp.float32) + be2_ref[...]
        enc_out_ref[...] = e2.astype(enc_out_ref.dtype)


def semantic_alignment_forward(decoder_hidden, encoder_outputs, params, *,
                               tile_s=1024, stream_dtype=None):
    """Pallas implementation of SemanticAlignmentModule.forward (batch_first=False).

    decoder_hidden:  [1, Dh]
    encoder_outputs: [S, E]
    tile_s:          sequence rows per grid step (streaming/online-softmax tile)
    stream_dtype:    optional dtype (e.g. jnp.bfloat16) used to stream
                     encoder_outputs from HBM; accumulation stays f32.
    Returns (encoder_linear2 [1,1,H], decoder_linear2 [1,1,H]).
    """
    S, E = encoder_outputs.shape
    _, Dh = decoder_hidden.shape
    H = params["enc_w2"].shape[1]
    out_dtype = encoder_outputs.dtype

    if stream_dtype is not None:
        encoder_outputs = encoder_outputs.astype(stream_dtype)

    # Sequence tiling: at most the sequence itself; otherwise a multiple of 8
    # (sublane-aligned). A ragged last tile is handled by masking in-kernel —
    # no full-S fallback, so VMEM use is bounded for arbitrarily long S.
    if S <= tile_s:
        tile_s = S                           # full-extent block is always layout-legal
    else:
        tile_s = max(8, (tile_s // 8) * 8)
    grid = (pl.cdiv(S, tile_s),)
    ragged = (S % tile_s) != 0

    score_w_row = params["score_w"].reshape(1, Dh)
    weight_args = (
        params["attn_w_h"], params["attn_w_e"], params["attn_b"],
        score_w_row,
        params["enc_w1"], params["enc_b1"], params["enc_w2"], params["enc_b2"],
        params["dec_w1"], params["dec_b1"], params["dec_w2"], params["dec_b2"],
    )

    kernel = functools.partial(_sam_kernel, seq_len=S, tile_s=tile_s, ragged=ragged)
    const = lambda i: (0, 0)

    # VMEM budget: double-buffered encoder tile + resident weights + headroom,
    # clamped to v7x's 64 MiB physical VMEM.
    enc_item = jnp.dtype(encoder_outputs.dtype).itemsize
    enc_tile_bytes = 2 * tile_s * E * enc_item
    weight_bytes = sum(int(w.size) * jnp.dtype(w.dtype).itemsize for w in weight_args)
    vmem_limit = int(min(max(2 * (enc_tile_bytes + weight_bytes) + (1 << 20), 16 << 20),
                         64 << 20))

    cost = pl.CostEstimate(
        flops=2 * S * E * Dh + 2 * S * Dh + 3 * S * E
              + 2 * (Dh * Dh + E * H + 2 * H * H + Dh * H),
        transcendentals=S * (Dh + 1) + 2 * H,
        bytes_accessed=S * E * enc_item + weight_bytes + Dh * 4 + 2 * H * 4,
    )

    enc2, dec2 = pl.pallas_call(
        kernel,
        out_shape=(
            jax.ShapeDtypeStruct((1, H), out_dtype),
            jax.ShapeDtypeStruct((1, H), decoder_hidden.dtype),
        ),
        grid=grid,
        in_specs=[
            pl.BlockSpec((1, Dh), const),                   # decoder hidden (resident)
            pl.BlockSpec((tile_s, E), lambda i: (i, 0)),    # encoder outputs (tiled over S)
        ] + [pl.BlockSpec(w.shape, const) for w in weight_args],
        out_specs=(
            pl.BlockSpec((1, H), const),
            pl.BlockSpec((1, H), const),
        ),
        scratch_shapes=[
            pltpu.VMEM((1, Dh), jnp.float32),   # hidden projection (computed once)
            pltpu.VMEM((1, E), jnp.float32),    # context accumulator
            pltpu.VMEM((1, 1), jnp.float32),    # running max
            pltpu.VMEM((1, 1), jnp.float32),    # running sum-exp
        ],
        compiler_params=pltpu.CompilerParams(
            # single grid axis is a sequential online-softmax reduction over S
            dimension_semantics=("arbitrary",),
            vmem_limit_bytes=vmem_limit,
        ),
        cost_estimate=cost,
    )(decoder_hidden, encoder_outputs, *weight_args)
    return enc2.reshape(1, 1, H), dec2.reshape(1, 1, H)


def init_params(key, encoder_hidden_size, decoder_hidden_size, hidden_size,
                dtype=jnp.float32):
    """nn.Linear-style init: U(-1/sqrt(fan_in), 1/sqrt(fan_in)); weights stored [in, out]."""
    E, Dh, H = encoder_hidden_size, decoder_hidden_size, hidden_size

    def linear(k, d_in, d_out):
        kw, kb = jax.random.split(k)
        bound = 1.0 / math.sqrt(d_in)
        w = jax.random.uniform(kw, (d_in, d_out), dtype, -bound, bound)
        b = jax.random.uniform(kb, (1, d_out), dtype, -bound, bound)
        return w, b

    k = jax.random.split(key, 6)
    # TreeAttention.attn = Linear(Dh + E, Dh); split its weight into the hidden
    # (first Dh rows) and encoder (last E rows) blocks -> no concat needed.
    attn_w, attn_b = linear(k[0], Dh + E, Dh)
    score_w, score_b = linear(k[1], Dh, 1)
    enc_w1, enc_b1 = linear(k[2], E, H)
    enc_w2, enc_b2 = linear(k[3], H, H)
    dec_w1, dec_b1 = linear(k[4], Dh, H)
    dec_w2, dec_b2 = linear(k[5], H, H)
    return {
        "attn_w_h": attn_w[:Dh], "attn_w_e": attn_w[Dh:], "attn_b": attn_b,
        "score_w": score_w, "score_b": score_b,   # score_b kept for the reference only
        "enc_w1": enc_w1, "enc_b1": enc_b1,
        "enc_w2": enc_w2, "enc_b2": enc_b2,
        "dec_w1": dec_w1, "dec_b1": dec_b1,
        "dec_w2": dec_w2, "dec_b2": dec_b2,
    }


def _reference(decoder_hidden, encoder_outputs, params):
    """Pure-JAX transcription of the PyTorch forward (batch=1, seq_mask=None)."""
    S = encoder_outputs.shape[0]
    hidden_rep = jnp.broadcast_to(decoder_hidden, (S, decoder_hidden.shape[1]))
    energy_in = jnp.concatenate([hidden_rep, encoder_outputs], axis=1)
    w_attn = jnp.concatenate([params["attn_w_h"], params["attn_w_e"]], axis=0)
    feat = jnp.tanh(energy_in @ w_attn + params["attn_b"])
    scores = (feat @ params["score_w"] + params["score_b"])[:, 0]           # [S]
    attn = jax.nn.softmax(scores)                                           # [S]
    ctx = attn[None, :] @ encoder_outputs                                   # [1, E]
    e1 = jnp.tanh(ctx @ params["enc_w1"] + params["enc_b1"])
    e2 = e1 @ params["enc_w2"] + params["enc_b2"]
    d1 = jnp.tanh(decoder_hidden @ params["dec_w1"] + params["dec_b1"])
    d2 = d1 @ params["dec_w2"] + params["dec_b2"]
    return e2.reshape(1, 1, -1), d2.reshape(1, 1, -1)


if __name__ == "__main__":
    encoder_hidden_size = 32
    decoder_hidden_size = 32
    hidden_size = 32

    key = jax.random.PRNGKey(0)
    k_params, k_dec, k_enc1, k_enc2 = jax.random.split(key, 4)
    params = init_params(k_params, encoder_hidden_size, decoder_hidden_size, hidden_size)
    decoder_hidden = jax.random.normal(k_dec, (1, decoder_hidden_size), jnp.float32)

    # TODO(synk): the PyTorch module only supports an effective batch of 1 in
    # batch_first=False mode (TreeAttention's cat forces it); seq_mask is always
    # None in SemanticAlignmentModule, so no masking branch is implemented.

    # Case 1: whole sequence fits in one tile (default tile clamps to S).
    enc_a = jax.random.normal(k_enc1, (192, encoder_hidden_size), jnp.float32)
    enc2a, dec2a = semantic_alignment_forward(decoder_hidden, enc_a, params)
    enc2a, dec2a = jax.block_until_ready((enc2a, dec2a))
    ref_ea, ref_da = _reference(decoder_hidden, enc_a, params)
    assert enc2a.shape == (1, 1, hidden_size) and dec2a.shape == (1, 1, hidden_size)
    assert jnp.allclose(enc2a, ref_ea, atol=1e-5, rtol=1e-5), "encoder branch mismatch (case 1)"
    assert jnp.allclose(dec2a, ref_da, atol=1e-5, rtol=1e-5), "decoder branch mismatch (case 1)"

    # Case 2: multi-tile grid with a ragged last tile (online softmax + mask).
    enc_b = jax.random.normal(k_enc2, (200, encoder_hidden_size), jnp.float32)
    enc2b, dec2b = semantic_alignment_forward(decoder_hidden, enc_b, params, tile_s=64)
    enc2b, dec2b = jax.block_until_ready((enc2b, dec2b))
    ref_eb, ref_db = _reference(decoder_hidden, enc_b, params)
    assert jnp.allclose(enc2b, ref_eb, atol=1e-5, rtol=1e-5), "encoder branch mismatch (case 2)"
    assert jnp.allclose(dec2b, ref_db, atol=1e-5, rtol=1e-5), "decoder branch mismatch (case 2)"

    # Case 3: bf16 streaming of encoder_outputs (halves HBM traffic), f32 accumulation.
    enc2c, dec2c = semantic_alignment_forward(decoder_hidden, enc_b, params,
                                              tile_s=64, stream_dtype=jnp.bfloat16)
    enc2c, dec2c = jax.block_until_ready((enc2c, dec2c))
    ref_ec, ref_dc = _reference(
        decoder_hidden, enc_b.astype(jnp.bfloat16).astype(jnp.float32), params)
    assert jnp.allclose(enc2c, ref_ec, atol=5e-3, rtol=5e-3), "encoder branch mismatch (bf16)"
    assert jnp.allclose(dec2c, ref_dc, atol=1e-5, rtol=1e-5), "decoder branch mismatch (bf16)"

    print("KERNEL_OK")
</pallas_src>

<mosaic_0001>
module attributes {stable_mosaic.version = 11 : i64} {
  func.func @_sam_kernel(%arg0: i32, %arg1: memref<1x32xf32, #tpu.memory_space<vmem>>, %arg2: memref<192x32xf32, #tpu.memory_space<vmem>>, %arg3: memref<32x32xf32, #tpu.memory_space<vmem>>, %arg4: memref<32x32xf32, #tpu.memory_space<vmem>>, %arg5: memref<1x32xf32, #tpu.memory_space<vmem>>, %arg6: memref<1x32xf32, #tpu.memory_space<vmem>>, %arg7: memref<32x32xf32, #tpu.memory_space<vmem>>, %arg8: memref<1x32xf32, #tpu.memory_space<vmem>>, %arg9: memref<32x32xf32, #tpu.memory_space<vmem>>, %arg10: memref<1x32xf32, #tpu.memory_space<vmem>>, %arg11: memref<32x32xf32, #tpu.memory_space<vmem>>, %arg12: memref<1x32xf32, #tpu.memory_space<vmem>>, %arg13: memref<32x32xf32, #tpu.memory_space<vmem>>, %arg14: memref<1x32xf32, #tpu.memory_space<vmem>>, %arg15: memref<1x32xf32, #tpu.memory_space<vmem>>, %arg16: memref<1x32xf32, #tpu.memory_space<vmem>>, %arg17: memref<1x32xf32, #tpu.memory_space<vmem>>, %arg18: memref<1x32xf32, #tpu.memory_space<vmem>>, %arg19: memref<1x1xf32, #tpu.memory_space<vmem>>, %arg20: memref<1x1xf32, #tpu.memory_space<vmem>>) attributes {dimension_semantics = [#tpu.dimension_semantics<arbitrary>], iteration_bounds = array<i64: 1>, scalar_prefetch = 0 : i64, scratch_operands = 4 : i64, tpu.core_type = #tpu.core_type<tc>, window_params = [{pipeline_mode = #tpu.pipeline_mode<synchronous>, transform_indices = @transform_0, window_bounds = array<i64: 1, 32>}, {transform_indices = @transform_1, window_bounds = array<i64: 192, 32>}, {pipeline_mode = #tpu.pipeline_mode<synchronous>, transform_indices = @transform_2, window_bounds = array<i64: 32, 32>}, {pipeline_mode = #tpu.pipeline_mode<synchronous>, transform_indices = @transform_3, window_bounds = array<i64: 32, 32>}, {pipeline_mode = #tpu.pipeline_mode<synchronous>, transform_indices = @transform_4, window_bounds = array<i64: 1, 32>}, {pipeline_mode = #tpu.pipeline_mode<synchronous>, transform_indices = @transform_5, window_bounds = array<i64: 1, 32>}, {pipeline_mode = #tpu.pipeline_mode<synchronous>, transform_indices = @transform_6, window_bounds = array<i64: 32, 32>}, {pipeline_mode = #tpu.pipeline_mode<synchronous>, transform_indices = @transform_7, window_bounds = array<i64: 1, 32>}, {pipeline_mode = #tpu.pipeline_mode<synchronous>, transform_indices = @transform_8, window_bounds = array<i64: 32, 32>}, {pipeline_mode = #tpu.pipeline_mode<synchronous>, transform_indices = @transform_9, window_bounds = array<i64: 1, 32>}, {pipeline_mode = #tpu.pipeline_mode<synchronous>, transform_indices = @transform_10, window_bounds = array<i64: 32, 32>}, {pipeline_mode = #tpu.pipeline_mode<synchronous>, transform_indices = @transform_11, window_bounds = array<i64: 1, 32>}, {pipeline_mode = #tpu.pipeline_mode<synchronous>, transform_indices = @transform_12, window_bounds = array<i64: 32, 32>}, {pipeline_mode = #tpu.pipeline_mode<synchronous>, transform_indices = @transform_13, window_bounds = array<i64: 1, 32>}, {pipeline_mode = #tpu.pipeline_mode<synchronous>, transform_indices = @transform_14, window_bounds = array<i64: 1, 32>}, {pipeline_mode = #tpu.pipeline_mode<synchronous>, transform_indices = @transform_15, window_bounds = array<i64: 1, 32>}]} {
    %c0_i32 = arith.constant 0 : i32
    %0 = arith.cmpi eq, %arg0, %c0_i32 : i32
    %1 = arith.extui %0 : i1 to i32
    %c0_i32_0 = arith.constant 0 : i32
    %2 = arith.cmpi ne, %1, %c0_i32_0 : i32
    scf.if %2 {
      %c0_26 = arith.constant 0 : index
      %c0_27 = arith.constant 0 : index
      %43 = vector.load %arg1[%c0_26, %c0_27] : memref<1x32xf32, #tpu.memory_space<vmem>>, vector<1x32xf32>
      %c0_28 = arith.constant 0 : index
      %c0_29 = arith.constant 0 : index
      %44 = vector.load %arg3[%c0_28, %c0_29] : memref<32x32xf32, #tpu.memory_space<vmem>>, vector<32x32xf32>
      %cst_30 = arith.constant dense<0.000000e+00> : vector<1x32xf32>
      %45 = tpu.matmul %43, %44, %cst_30 {dimension_numbers = #tpu.dot_dimension_numbers<[1], [0], [0], [1], [0, 0, 1, 1], [], []>} : vector<1x32xf32>, vector<32x32xf32>, vector<1x32xf32> -> vector<1x32xf32>
      %c0_31 = arith.constant 0 : index
      %c0_32 = arith.constant 0 : index
      %46 = vector.load %arg5[%c0_31, %c0_32] : memref<1x32xf32, #tpu.memory_space<vmem>>, vector<1x32xf32>
      %47 = arith.addf %45, %46 : vector<1x32xf32>
      %c0_33 = arith.constant 0 : index
      %c0_34 = arith.constant 0 : index
      %48 = vector.load %arg17[%c0_33, %c0_34] : memref<1x32xf32, #tpu.memory_space<vmem>>, vector<1x32xf32>
      tpu.vector_store %arg17[%c0_33, %c0_34], %47 {strides = array<i32>} : memref<1x32xf32, #tpu.memory_space<vmem>>, vector<1x32xf32>,
      %cst_35 = arith.constant 0.000000e+00 : f32
      %49 = vector.broadcast %cst_35 : f32 to vector<1x32xf32>
      %c0_36 = arith.constant 0 : index
      %c0_37 = arith.constant 0 : index
      %50 = vector.load %arg18[%c0_36, %c0_37] : memref<1x32xf32, #tpu.memory_space<vmem>>, vector<1x32xf32>
      tpu.vector_store %arg18[%c0_36, %c0_37], %49 {strides = array<i32>} : memref<1x32xf32, #tpu.memory_space<vmem>>, vector<1x32xf32>,
      %cst_38 = arith.constant 0xFF800000 : f32
      %51 = vector.broadcast %cst_38 : f32 to vector<1x1xf32>
      %c0_39 = arith.constant 0 : index
      %c0_40 = arith.constant 0 : index
      %52 = vector.load %arg19[%c0_39, %c0_40] : memref<1x1xf32, #tpu.memory_space<vmem>>, vector<1x1xf32>
      tpu.vector_store %arg19[%c0_39, %c0_40], %51 {strides = array<i32>} : memref<1x1xf32, #tpu.memory_space<vmem>>, vector<1x1xf32>,
      %cst_41 = arith.constant 0.000000e+00 : f32
      %53 = vector.broadcast %cst_41 : f32 to vector<1x1xf32>
      %c0_42 = arith.constant 0 : index
      %c0_43 = arith.constant 0 : index
      %54 = vector.load %arg20[%c0_42, %c0_43] : memref<1x1xf32, #tpu.memory_space<vmem>>, vector<1x1xf32>
      tpu.vector_store %arg20[%c0_42, %c0_43], %53 {strides = array<i32>} : memref<1x1xf32, #tpu.memory_space<vmem>>, vector<1x1xf32>,
      %c0_44 = arith.constant 0 : index
      %c0_45 = arith.constant 0 : index
      %55 = vector.load %arg11[%c0_44, %c0_45] : memref<32x32xf32, #tpu.memory_space<vmem>>, vector<32x32xf32>
      %cst_46 = arith.constant dense<0.000000e+00> : vector<1x32xf32>
      %56 = tpu.matmul %43, %55, %cst_46 {dimension_numbers = #tpu.dot_dimension_numbers<[1], [0], [0], [1], [0, 0, 1, 1], [], []>} : vector<1x32xf32>, vector<32x32xf32>, vector<1x32xf32> -> vector<1x32xf32>
      %c0_47 = arith.constant 0 : index
      %c0_48 = arith.constant 0 : index
      %57 = vector.load %arg12[%c0_47, %c0_48] : memref<1x32xf32, #tpu.memory_space<vmem>>, vector<1x32xf32>
      %58 = arith.addf %56, %57 : vector<1x32xf32>
      %59 = math.tanh %58 : vector<1x32xf32>
      %c0_49 = arith.constant 0 : index
      %c0_50 = arith.constant 0 : index
      %60 = vector.load %arg13[%c0_49, %c0_50] : memref<32x32xf32, #tpu.memory_space<vmem>>, vector<32x32xf32>
      %cst_51 = arith.constant dense<0.000000e+00> : vector<1x32xf32>
      %61 = tpu.matmul %59, %60, %cst_51 {dimension_numbers = #tpu.dot_dimension_numbers<[1], [0], [0], [1], [0, 0, 1, 1], [], []>} : vector<1x32xf32>, vector<32x32xf32>, vector<1x32xf32> -> vector<1x32xf32>
      %c0_52 = arith.constant 0 : index
      %c0_53 = arith.constant 0 : index
      %62 = vector.load %arg14[%c0_52, %c0_53] : memref<1x32xf32, #tpu.memory_space<vmem>>, vector<1x32xf32>
      %63 = arith.addf %61, %62 : vector<1x32xf32>
      %c0_54 = arith.constant 0 : index
      %c0_55 = arith.constant 0 : index
      %64 = vector.load %arg16[%c0_54, %c0_55] : memref<1x32xf32, #tpu.memory_space<vmem>>, vector<1x32xf32>
      tpu.vector_store %arg16[%c0_54, %c0_55], %63 {strides = array<i32>} : memref<1x32xf32, #tpu.memory_space<vmem>>, vector<1x32xf32>,
    } else {
    }
    %c0 = arith.constant 0 : index
    %c0_1 = arith.constant 0 : index
    %3 = vector.load %arg2[%c0, %c0_1] : memref<192x32xf32, #tpu.memory_space<vmem>>, vector<192x32xf32>
    %c0_2 = arith.constant 0 : index
    %c0_3 = arith.constant 0 : index
    %4 = vector.load %arg4[%c0_2, %c0_3] : memref<32x32xf32, #tpu.memory_space<vmem>>, vector<32x32xf32>
    %cst = arith.constant dense<0.000000e+00> : vector<192x32xf32>
    %5 = tpu.matmul %3, %4, %cst {dimension_numbers = #tpu.dot_dimension_numbers<[1], [0], [0], [1], [0, 0, 1, 1], [], []>} : vector<192x32xf32>, vector<32x32xf32>, vector<192x32xf32> -> vector<192x32xf32>
    %c0_4 = arith.constant 0 : index
    %c0_5 = arith.constant 0 : index
    %6 = vector.load %arg17[%c0_4, %c0_5] : memref<1x32xf32, #tpu.memory_space<vmem>>, vector<1x32xf32>
    %7 = vector.broadcast %6 : vector<1x32xf32> to vector<192x32xf32>
    %8 = arith.addf %5, %7 : vector<192x32xf32>
    %9 = math.tanh %8 : vector<192x32xf32>
    %c0_6 = arith.constant 0 : index
    %c0_7 = arith.constant 0 : index
    %10 = vector.load %arg6[%c0_6, %c0_7] : memref<1x32xf32, #tpu.memory_space<vmem>>, vector<1x32xf32>
    %11 = vector.broadcast %10 : vector<1x32xf32> to vector<192x32xf32>
    %12 = arith.mulf %9, %11 : vector<192x32xf32>
    %cst_8 = arith.constant dense<0.000000e+00> : vector<192xf32>
    %13 = vector.multi_reduction <add>, %12, %cst_8 [1] : vector<192x32xf32> to vector<192xf32>
    %14 = vector.shape_cast %13 : vector<192xf32> to vector<192x1xf32>
    %c0_9 = arith.constant 0 : index
    %c0_10 = arith.constant 0 : index
    %15 = vector.load %arg19[%c0_9, %c0_10] : memref<1x1xf32, #tpu.memory_space<vmem>>, vector<1x1xf32>
    %cst_11 = arith.constant dense<0xFF800000> : vector<1xf32>
    %16 = vector.multi_reduction <maximumf>, %14, %cst_11 [0] : vector<192x1xf32> to vector<1xf32>
    %17 = vector.shape_cast %16 : vector<1xf32> to vector<1x1xf32>
    %18 = arith.maximumf %15, %17 : vector<1x1xf32>
    %19 = arith.subf %15, %18 : vector<1x1xf32>
    %20 = math.exp %19 : vector<1x1xf32>
    %21 = vector.broadcast %18 : vector<1x1xf32> to vector<192x1xf32>
    %22 = arith.subf %14, %21 : vector<192x1xf32>
    %23 = math.exp %22 : vector<192x1xf32>
    %c0_12 = arith.constant 0 : index
    %c0_13 = arith.constant 0 : index
    %24 = vector.load %arg20[%c0_12, %c0_13] : memref<1x1xf32, #tpu.memory_space<vmem>>, vector<1x1xf32>
    %25 = arith.mulf %20, %24 : vector<1x1xf32>
    %cst_14 = arith.constant dense<0.000000e+00> : vector<1xf32>
    %26 = vector.multi_reduction <add>, %23, %cst_14 [0] : vector<192x1xf32> to vector<1xf32>
    %27 = vector.shape_cast %26 : vector<1xf32> to vector<1x1xf32>
    %28 = arith.addf %25, %27 : vector<1x1xf32>
    %c0_15 = arith.constant 0 : index
    %c0_16 = arith.constant 0 : index
    %29 = vector.load %arg20[%c0_15, %c0_16] : memref<1x1xf32, #tpu.memory_space<vmem>>, vector<1x1xf32>
    tpu.vector_store %arg20[%c0_15, %c0_16], %28 {strides = array<i32>} : memref<1x1xf32, #tpu.memory_space<vmem>>, vector<1x1xf32>,
    %c0_17 = arith.constant 0 : index
    %c0_18 = arith.constant 0 : index
    %30 = vector.load %arg18[%c0_17, %c0_18] : memref<1x32xf32, #tpu.memory_space<vmem>>, vector<1x32xf32>
    %31 = vector.broadcast %20 : vector<1x1xf32> to vector<1x32xf32>
    %32 = arith.mulf %31, %30 : vector<1x32xf32>
    %33 = vector.broadcast %23 : vector<192x1xf32> to vector<192x32xf32>
    %34 = arith.mulf %33, %3 : vector<192x32xf32>
    %cst_19 = arith.constant dense<0.000000e+00> : vector<32xf32>
    %35 = vector.multi_reduction <add>, %34, %cst_19 [0] : vector<192x32xf32> to vector<32xf32>
    %36 = vector.shape_cast %35 : vector<32xf32> to vector<1x32xf32>
    %37 = arith.addf %32, %36 : vector<1x32xf32>
    %c0_20 = arith.constant 0 : index
    %c0_21 = arith.constant 0 : index
    %38 = vector.load %arg18[%c0_20, %c0_21] : memref<1x32xf32, #tpu.memory_space<vmem>>, vector<1x32xf32>
    tpu.vector_store %arg18[%c0_20, %c0_21], %37 {strides = array<i32>} : memref<1x32xf32, #tpu.memory_space<vmem>>, vector<1x32xf32>,
    %c0_22 = arith.constant 0 : index
    %c0_23 = arith.constant 0 : index
    %39 = vector.load %arg19[%c0_22, %c0_23] : memref<1x1xf32, #tpu.memory_space<vmem>>, vector<1x1xf32>
    tpu.vector_store %arg19[%c0_22, %c0_23], %18 {strides = array<i32>} : memref<1x1xf32, #tpu.memory_space<vmem>>, vector<1x1xf32>,
    %c0_i32_24 = arith.constant 0 : i32
    %40 = arith.cmpi eq, %arg0, %c0_i32_24 : i32
    %41 = arith.extui %40 : i1 to i32
    %c0_i32_25 = arith.constant 0 : i32
    %42 = arith.cmpi ne, %41, %c0_i32_25 : i32
    scf.if %42 {
      %c0_26 = arith.constant 0 : index
      %c0_27 = arith.constant 0 : index
      %43 = vector.load %arg18[%c0_26, %c0_27] : memref<1x32xf32, #tpu.memory_space<vmem>>, vector<1x32xf32>
      %c0_28 = arith.constant 0 : index
      %c0_29 = arith.constant 0 : index
      %44 = vector.load %arg20[%c0_28, %c0_29] : memref<1x1xf32, #tpu.memory_space<vmem>>, vector<1x1xf32>
      %45 = vector.broadcast %44 : vector<1x1xf32> to vector<1x32xf32>
      %46 = arith.divf %43, %45 : vector<1x32xf32>
      %c0_30 = arith.constant 0 : index
      %c0_31 = arith.constant 0 : index
      %47 = vector.load %arg7[%c0_30, %c0_31] : memref<32x32xf32, #tpu.memory_space<vmem>>, vector<32x32xf32>
      %cst_32 = arith.constant dense<0.000000e+00> : vector<1x32xf32>
      %48 = tpu.matmul %46, %47, %cst_32 {dimension_numbers = #tpu.dot_dimension_numbers<[1], [0], [0], [1], [0, 0, 1, 1], [], []>} : vector<1x32xf32>, vector<32x32xf32>, vector<1x32xf32> -> vector<1x32xf32>
      %c0_33 = arith.constant 0 : index
      %c0_34 = arith.constant 0 : index
      %49 = vector.load %arg8[%c0_33, %c0_34] : memref<1x32xf32, #tpu.memory_space<vmem>>, vector<1x32xf32>
      %50 = arith.addf %48, %49 : vector<1x32xf32>
      %51 = math.tanh %50 : vector<1x32xf32>
      %c0_35 = arith.constant 0 : index
      %c0_36 = arith.constant 0 : index
      %52 = vector.load %arg9[%c0_35, %c0_36] : memref<32x32xf32, #tpu.memory_space<vmem>>, vector<32x32xf32>
      %cst_37 = arith.constant dense<0.000000e+00> : vector<1x32xf32>
      %53 = tpu.matmul %51, %52, %cst_37 {dimension_numbers = #tpu.dot_dimension_numbers<[1], [0], [0], [1], [0, 0, 1, 1], [], []>} : vector<1x32xf32>, vector<32x32xf32>, vector<1x32xf32> -> vector<1x32xf32>
      %c0_38 = arith.constant 0 : index
      %c0_39 = arith.constant 0 : index
      %54 = vector.load %arg10[%c0_38, %c0_39] : memref<1x32xf32, #tpu.memory_space<vmem>>, vector<1x32xf32>
      %55 = arith.addf %53, %54 : vector<1x32xf32>
      %c0_40 = arith.constant 0 : index
      %c0_41 = arith.constant 0 : index
      %56 = vector.load %arg15[%c0_40, %c0_41] : memref<1x32xf32, #tpu.memory_space<vmem>>, vector<1x32xf32>
      tpu.vector_store %arg15[%c0_40, %c0_41], %55 {strides = array<i32>} : memref<1x32xf32, #tpu.memory_space<vmem>>, vector<1x32xf32>,
    } else {
    }
    return
  }
  func.func @transform_0(%arg0: i32) -> (i32, i32) {
    %c0_i32 = arith.constant 0 : i32
    %c0_i32_0 = arith.constant 0 : i32
    %c0_i32_1 = arith.constant 0 : i32
    return %c0_i32, %c0_i32_0 : i32, i32
  }
  func.func @transform_1(%arg0: i32) -> (i32, i32) {
    %c0_i32 = arith.constant 0 : i32
    %c0_i32_0 = arith.constant 0 : i32
    return %arg0, %c0_i32 : i32, i32
  }
  func.func @transform_2(%arg0: i32) -> (i32, i32) {
    %c0_i32 = arith.constant 0 : i32
    %c0_i32_0 = arith.constant 0 : i32
    %c0_i32_1 = arith.constant 0 : i32
    return %c0_i32, %c0_i32_0 : i32, i32
  }
  func.func @transform_3(%arg0: i32) -> (i32, i32) {
    %c0_i32 = arith.constant 0 : i32
    %c0_i32_0 = arith.constant 0 : i32
    %c0_i32_1 = arith.constant 0 : i32
    return %c0_i32, %c0_i32_0 : i32, i32
  }
  func.func @transform_4(%arg0: i32) -> (i32, i32) {
    %c0_i32 = arith.constant 0 : i32
    %c0_i32_0 = arith.constant 0 : i32
    %c0_i32_1 = arith.constant 0 : i32
    return %c0_i32, %c0_i32_0 : i32, i32
  }
  func.func @transform_5(%arg0: i32) -> (i32, i32) {
    %c0_i32 = arith.constant 0 : i32
    %c0_i32_0 = arith.constant 0 : i32
    %c0_i32_1 = arith.constant 0 : i32
    return %c0_i32, %c0_i32_0 : i32, i32
  }
  func.func @transform_6(%arg0: i32) -> (i32, i32) {
    %c0_i32 = arith.constant 0 : i32
    %c0_i32_0 = arith.constant 0 : i32
    %c0_i32_1 = arith.constant 0 : i32
    return %c0_i32, %c0_i32_0 : i32, i32
  }
  func.func @transform_7(%arg0: i32) -> (i32, i32) {
    %c0_i32 = arith.constant 0 : i32
    %c0_i32_0 = arith.constant 0 : i32
    %c0_i32_1 = arith.constant 0 : i32
    return %c0_i32, %c0_i32_0 : i32, i32
  }
  func.func @transform_8(%arg0: i32) -> (i32, i32) {
    %c0_i32 = arith.constant 0 : i32
    %c0_i32_0 = arith.constant 0 : i32
    %c0_i32_1 = arith.constant 0 : i32
    return %c0_i32, %c0_i32_0 : i32, i32
  }
  func.func @transform_9(%arg0: i32) -> (i32, i32) {
    %c0_i32 = arith.constant 0 : i32
    %c0_i32_0 = arith.constant 0 : i32
    %c0_i32_1 = arith.constant 0 : i32
    return %c0_i32, %c0_i32_0 : i32, i32
  }
  func.func @transform_10(%arg0: i32) -> (i32, i32) {
    %c0_i32 = arith.constant 0 : i32
    %c0_i32_0 = arith.constant 0 : i32
    %c0_i32_1 = arith.constant 0 : i32
    return %c0_i32, %c0_i32_0 : i32, i32
  }
  func.func @transform_11(%arg0: i32) -> (i32, i32) {
    %c0_i32 = arith.constant 0 : i32
    %c0_i32_0 = arith.constant 0 : i32
    %c0_i32_1 = arith.constant 0 : i32
    return %c0_i32, %c0_i32_0 : i32, i32
  }
  func.func @transform_12(%arg0: i32) -> (i32, i32) {
    %c0_i32 = arith.constant 0 : i32
    %c0_i32_0 = arith.constant 0 : i32
    %c0_i32_1 = arith.constant 0 : i32
    return %c0_i32, %c0_i32_0 : i32, i32
  }
  func.func @transform_13(%arg0: i32) -> (i32, i32) {
    %c0_i32 = arith.constant 0 : i32
    %c0_i32_0 = arith.constant 0 : i32
    %c0_i32_1 = arith.constant 0 : i32
    return %c0_i32, %c0_i32_0 : i32, i32
  }
  func.func @transform_14(%arg0: i32) -> (i32, i32) {
    %c0_i32 = arith.constant 0 : i32
    %c0_i32_0 = arith.constant 0 : i32
    %c0_i32_1 = arith.constant 0 : i32
    return %c0_i32, %c0_i32_0 : i32, i32
  }
  func.func @transform_15(%arg0: i32) -> (i32, i32) {
    %c0_i32 = arith.constant 0 : i32
    %c0_i32_0 = arith.constant 0 : i32
    %c0_i32_1 = arith.constant 0 : i32
    return %c0_i32, %c0_i32_0 : i32, i32
  }
}

</mosaic_0001>

<llo_original>
// kernel: tpu_custom_call.1
$region0: #{tpu_custom_call.1}
  #allocation0 [shape = 'u32[]', space=smem, size = 0x4, offset = 0x4, fixed_abs, tag = 'smem constant byte address 0x4 - core index']
  #allocation1 [shape = 'u32[144,128]{1,0:T(1,128)}', space=vmem, size = 0x12000, scoped, tag = 'internal scratch']
  #allocation2 [shape = 'f32[1,32]{1,0:T(1,128)}', space=vmem, size = 0x200, scoped, tag = 'scratch operand']
  #allocation3 [shape = 'f32[1,32]{1,0:T(1,128)}', space=vmem, size = 0x200, scoped, tag = 'scratch operand']
  #allocation4 [shape = 'f32[1,1]{1,0:T(1,128)}', space=vmem, size = 0x200, scoped, tag = 'scratch operand']
  #allocation5 [shape = 'f32[1,1]{1,0:T(1,128)}', space=vmem, size = 0x200, scoped, tag = 'scratch operand']
  %s0 = inlined_call_operand.vmem [shape: f32[1,32], index: 0, kind: input, shape index: {}]
  %s1 = inlined_call_operand.vmem [shape: f32[192,32], index: 1, kind: input, shape index: {}]
  %s2 = inlined_call_operand.vmem [shape: f32[32,32], index: 2, kind: input, shape index: {}]
  %s3 = inlined_call_operand.vmem [shape: f32[32,32], index: 3, kind: input, shape index: {}]
  %s4 = inlined_call_operand.vmem [shape: f32[1,32], index: 4, kind: input, shape index: {}]
  %s5 = inlined_call_operand.vmem [shape: f32[1,32], index: 5, kind: input, shape index: {}]
  %s6 = inlined_call_operand.vmem [shape: f32[32,32], index: 6, kind: input, shape index: {}]
  %s7 = inlined_call_operand.vmem [shape: f32[1,32], index: 7, kind: input, shape index: {}]
  %s8 = inlined_call_operand.vmem [shape: f32[32,32], index: 8, kind: input, shape index: {}]
  %s9 = inlined_call_operand.vmem [shape: f32[1,32], index: 9, kind: input, shape index: {}]
  %s10 = inlined_call_operand.vmem [shape: f32[32,32], index: 10, kind: input, shape index: {}]
  %s11 = inlined_call_operand.vmem [shape: f32[1,32], index: 11, kind: input, shape index: {}]
  %s12 = inlined_call_operand.vmem [shape: f32[32,32], index: 12, kind: input, shape index: {}]
  %s13 = inlined_call_operand.vmem [shape: f32[1,32], index: 13, kind: input, shape index: {}]
  %s14 = inlined_call_operand.hbm [shape: f32[1,32], index: 14, kind: output, shape index: {0}]
  %s15 = inlined_call_operand.hbm [shape: f32[1,32], index: 15, kind: output, shape index: {1}]
  %16 = xla_tuple %s14, %s15
  %s17 = sld [smem:[#allocation0]]
  $region82: #{tpu_custom_call.1} parent=0
    _
  %s19 = ssub.s32 1, %s17
  %s20 = scalar_select 0, %s19, %s17
  $region1: #{tpu_custom_call.1} parent=0
    #allocation6 [shape = 'u8[512]{0}', space=vmem, size = 0x400, scoped, tag = 'output window, operand 0, single buffered']
    #allocation7 [shape = 's32[1]{0}', space=sflag, size = 0x4, scoped, tag = 'scoped memory for tpu_custom_call.1']
    #allocation8 [shape = 'u8[512]{0}', space=vmem, size = 0x400, scoped, tag = 'output window, operand 1, single buffered']
    #allocation9 [shape = 's32[1]{0}', space=sflag, size = 0x4, scoped, tag = 'scoped memory for tpu_custom_call.1']
    %21 = vsyncpa [#allocation7], 0
    %22 = vsyncpa [#allocation9], 0
    // Predicated region
    $region2: #{tpu_custom_call.1} parent=1 // pred_check
      _
    $region3: #{tpu_custom_call.1} parent=1 // pred_check_branch
      %24 = sbr.rel (0) target = $region5
    $region4: #{tpu_custom_call.1} parent=1 // pred_region
      _
    $region5: #{tpu_custom_call.1} parent=1 // pred_fallthru
      _
    // Predicated region
    $region6: #{tpu_custom_call.1} parent=1 // pred_check
      _
    $region7: #{tpu_custom_call.1} parent=1 // pred_check_branch
      %26 = sbr.rel (0) target = $region9
    $region8: #{tpu_custom_call.1} parent=1 // pred_region
      _
    $region9: #{tpu_custom_call.1} parent=1 // pred_fallthru
      _
    // Predicated region
    $region10: #{tpu_custom_call.1} parent=1 // pred_check
      _
    $region11: #{tpu_custom_call.1} parent=1 // pred_check_branch
      %28 = sbr.rel (0) target = $region13
    $region12: #{tpu_custom_call.1} parent=1 // pred_region
      _
    $region13: #{tpu_custom_call.1} parent=1 // pred_fallthru
      _
    // Predicated region
    $region14: #{tpu_custom_call.1} parent=1 // pred_check
      _
    $region15: #{tpu_custom_call.1} parent=1 // pred_check_branch
      %30 = sbr.rel (0) target = $region17
    $region16: #{tpu_custom_call.1} parent=1 // pred_region
      _
    $region17: #{tpu_custom_call.1} parent=1 // pred_fallthru
      _
    // Predicated region
    $region18: #{tpu_custom_call.1} parent=1 // pred_check
      _
    $region19: #{tpu_custom_call.1} parent=1 // pred_check_branch
      %32 = sbr.rel (0) target = $region21
    $region20: #{tpu_custom_call.1} parent=1 // pred_region
      _
    $region21: #{tpu_custom_call.1} parent=1 // pred_fallthru
      _
    // Predicated region
    $region22: #{tpu_custom_call.1} parent=1 // pred_check
      _
    $region23: #{tpu_custom_call.1} parent=1 // pred_check_branch
      %34 = sbr.rel (0) target = $region25
    $region24: #{tpu_custom_call.1} parent=1 // pred_region
      _
    $region25: #{tpu_custom_call.1} parent=1 // pred_fallthru
      _
    // Predicated region
    $region26: #{tpu_custom_call.1} parent=1 // pred_check
      _
    $region27: #{tpu_custom_call.1} parent=1 // pred_check_branch
      %36 = sbr.rel (0) target = $region29
    $region28: #{tpu_custom_call.1} parent=1 // pred_region
      _
    $region29: #{tpu_custom_call.1} parent=1 // pred_fallthru
      _
    // Predicated region
    $region30: #{tpu_custom_call.1} parent=1 // pred_check
      _
    $region31: #{tpu_custom_call.1} parent=1 // pred_check_branch
      %38 = sbr.rel (0) target = $region33
    $region32: #{tpu_custom_call.1} parent=1 // pred_region
      _
    $region33: #{tpu_custom_call.1} parent=1 // pred_fallthru
      _
    // Predicated region
    $region34: #{tpu_custom_call.1} parent=1 // pred_check
      _
    $region35: #{tpu_custom_call.1} parent=1 // pred_check_branch
      %40 = sbr.rel (0) target = $region37
    $region36: #{tpu_custom_call.1} parent=1 // pred_region
      _
    $region37: #{tpu_custom_call.1} parent=1 // pred_fallthru
      _
    // Predicated region
    $region38: #{tpu_custom_call.1} parent=1 // pred_check
      _
    $region39: #{tpu_custom_call.1} parent=1 // pred_check_branch
      %42 = sbr.rel (0) target = $region41
    $region40: #{tpu_custom_call.1} parent=1 // pred_region
      _
    $region41: #{tpu_custom_call.1} parent=1 // pred_fallthru
      _
    // Predicated region
    $region42: #{tpu_custom_call.1} parent=1 // pred_check
      _
    $region43: #{tpu_custom_call.1} parent=1 // pred_check_branch
      %44 = sbr.rel (0) target = $region45
    $region44: #{tpu_custom_call.1} parent=1 // pred_region
      _
    $region45: #{tpu_custom_call.1} parent=1 // pred_fallthru
      _
    // Predicated region
    $region46: #{tpu_custom_call.1} parent=1 // pred_check
      _
    $region47: #{tpu_custom_call.1} parent=1 // pred_check_branch
      %46 = sbr.rel (0) target = $region49
    $region48: #{tpu_custom_call.1} parent=1 // pred_region
      _
    $region49: #{tpu_custom_call.1} parent=1 // pred_fallthru
      _
    // Predicated region
    $region50: #{tpu_custom_call.1} parent=1 // pred_check
      _
    $region51: #{tpu_custom_call.1} parent=1 // pred_check_branch
      %48 = sbr.rel (0) target = $region53
    $region52: #{tpu_custom_call.1} parent=1 // pred_region
      _
    $region53: #{tpu_custom_call.1} parent=1 // pred_fallthru
      _
    // Predicated region
    $region54: #{tpu_custom_call.1} parent=1 // pred_check
      _
    $region55: #{tpu_custom_call.1} parent=1 // pred_check_branch
      %50 = sbr.rel (0) target = $region57
    $region56: #{tpu_custom_call.1} parent=1 // pred_region
      _
    $region57: #{tpu_custom_call.1} parent=1 // pred_fallthru
      _
    %p51 = scmp.eq.s32.totalorder 0, 0
    // Predicated region
    $region58: #{tpu_custom_call.1} parent=1 // pred_check
      %p52 = pneg %p51
    $region59: #{tpu_custom_call.1} parent=1 // pred_check_branch
      %54 = sbr.rel (%p52) target = $region61
    $region60: #{tpu_custom_call.1} parent=1 // pred_region
      %v55 = vld [vmem:[%s0] sm:$0x1]
      %v56 = vld [vmem:[%s2] sm:$0xff]
      %v57 = vld [vmem:[%s2 + $0x8] sm:$0xff]
      %v58 = vld [vmem:[%s2 + $0x10] sm:$0xff]
      %v59 = vld [vmem:[%s2 + $0x18] sm:$0xff]
      %v60 = vld [vmem:[%s4] sm:$0x1]
      %vm61 = vcmask 261120
      %v63 = vsel %vm61, %v55, 0
      %65 = vmatprep.subr.mxu0 0.0
      %66 = vmatpush1.msra.mxu0 %v56
      %67 = vmatprep.subr.mxu0 0.0
      %68 = vmatpush1.msra.mxu0 %v57
      %69 = vmatprep.subr.mxu0 0.0
      %70 = vmatpush1.msra.mxu0 %v58
      %71 = vmatprep.subr.mxu0 0.0
      %72 = vmatpush1.msra.mxu0 %v59
      %73 = vmatprep.subr.mxu0 0.0
      %74 = vmatpush1.msra.mxu0 0.0
      %75 = vmatprep.subr.mxu0 0.0
      %76 = vmatpush1.msra.mxu0 0.0
      %77 = vmatprep.subr.mxu0 0.0
      %78 = vmatpush1.msra.mxu0 0.0
      %79 = vmatprep.subr.mxu0 0.0
      %80 = vmatpush1.msra.mxu0 0.0
      %81 = vmatprep.subr.mxu0 0.0
      %82 = vmatpush1.msra.mxu0 0.0
      %83 = vmatprep.subr.mxu0 0.0
      %84 = vmatpush1.msra.mxu0 0.0
      %85 = vmatprep.subr.mxu0 0.0
      %86 = vmatpush1.msra.mxu0 0.0
      %87 = vmatprep.subr.mxu0 0.0
      %88 = vmatpush1.msra.mxu0 0.0
      %89 = vmatprep.subr.mxu0 0.0
      %90 = vmatpush1.msra.mxu0 0.0
      %91 = vmatprep.subr.mxu0 0.0
      %92 = vmatpush1.msra.mxu0 0.0
      %93 = vmatprep.subr.mxu0 0.0
      %94 = vmatpush1.msra.mxu0 0.0
      %95 = vmatprep.subr.mxu0 0.0
      %96 = vmatpush1.msra.mxu0 0.0
      %97 = vmatprep.subr.mxu0 0.0
      %98 = vmatpush1.msra.mxu0 0.0
      %99 = vmatprep.subr.mxu0 0.0
      %100 = vmatpush1.msra.mxu0 0.0
      %101 = vmatprep.subr.mxu0 0.0
      %102 = vmatpush1.msra.mxu0 0.0
      %103 = vmatprep.subr.mxu0 0.0
      %104 = vmatpush1.msra.mxu0 0.0
      %105 = vmatprep.subr.mxu0 0.0
      %106 = vmatpush1.msra.mxu0 0.0
      %107 = vmatprep.subr.mxu0 0.0
      %108 = vmatpush1.msra.mxu0 0.0
      %109 = vmatprep.subr.mxu0 0.0
      %110 = vmatpush1.msra.mxu0 0.0
      %111 = vmatprep.subr.mxu0 0.0
      %112 = vmatpush1.msra.mxu0 0.0
      %113 = vmatprep.subr.mxu0 0.0
      %114 = vmatpush1.msra.mxu0 0.0
      %115 = vmatprep.subr.mxu0 0.0
      %116 = vmatpush1.msra.mxu0 0.0
      %117 = vmatprep.subr.mxu0 0.0
      %118 = vmatpush1.msra.mxu0 0.0
      %119 = vmatprep.subr.mxu0 0.0
      %120 = vmatpush1.msra.mxu0 0.0
      %121 = vmatprep.subr.mxu0 0.0
      %122 = vmatpush1.msra.mxu0 0.0
      %123 = vmatprep.subr.mxu0 0.0
      %124 = vmatpush1.msra.mxu0 0.0
      %125 = vmatprep.subr.mxu0 0.0
      %126 = vmatpush1.msra.mxu0 0.0
      %127 = vmatprep.subr.mxu0 0.0
      %128 = vmatpush1.msra.mxu0 0.0
      %129 = vmatprep.mubr.f32.mxu0 0.0
      %130 = vmatmul.mubr.f32.gmra.mrb[0].mxu0 %v63
      %v131 = vpop.f32.mrb[0].mxu0
      %v132 = vadd.f32 %v60, %v131
      %v133 = vpop.f32.mrb[0].mxu0
      %134 = vdwg.mxu0
      %vm135 = vcmask 253952
      %136 = vst.msk [vmem:[#allocation2] sm:$0x1] %vm135, %v132
      %137 = vst.msk [vmem:[#allocation3] sm:$0x1] %vm135, 0.0
      %vm138 = vcmask 0
      %139 = vst.msk [vmem:[#allocation4] sm:$0x1] %vm138, -inf
      %140 = vst.msk [vmem:[#allocation5] sm:$0x1] %vm138, 0.0
      %v141 = vld [vmem:[%s10] sm:$0xff]
      %v142 = vld [vmem:[%s10 + $0x8] sm:$0xff]
      %v143 = vld [vmem:[%s10 + $0x10] sm:$0xff]
      %v144 = vld [vmem:[%s10 + $0x18] sm:$0xff]
      %v145 = vld [vmem:[%s11] sm:$0x1]
      %146 = vmatprep.subr.mxu0 0.0
      %147 = vmatpush1.msra.mxu0 %v141
      %148 = vmatprep.subr.mxu0 0.0
      %149 = vmatpush1.msra.mxu0 %v142
      %150 = vmatprep.subr.mxu0 0.0
      %151 = vmatpush1.msra.mxu0 %v143
      %152 = vmatprep.subr.mxu0 0.0
      %153 = vmatpush1.msra.mxu0 %v144
      %154 = vmatprep.subr.mxu0 0.0
      %155 = vmatpush1.msra.mxu0 0.0
      %156 = vmatprep.subr.mxu0 0.0
      %157 = vmatpush1.msra.mxu0 0.0
      %158 = vmatprep.subr.mxu0 0.0
      %159 = vmatpush1.msra.mxu0 0.0
      %160 = vmatprep.subr.mxu0 0.0
      %161 = vmatpush1.msra.mxu0 0.0
      %162 = vmatprep.subr.mxu0 0.0
      %163 = vmatpush1.msra.mxu0 0.0
      %164 = vmatprep.subr.mxu0 0.0
      %165 = vmatpush1.msra.mxu0 0.0
      %166 = vmatprep.subr.mxu0 0.0
      %167 = vmatpush1.msra.mxu0 0.0
      %168 = vmatprep.subr.mxu0 0.0
      %169 = vmatpush1.msra.mxu0 0.0
      %170 = vmatprep.subr.mxu0 0.0
      %171 = vmatpush1.msra.mxu0 0.0
      %172 = vmatprep.subr.mxu0 0.0
      %173 = vmatpush1.msra.mxu0 0.0
      %174 = vmatprep.subr.mxu0 0.0
      %175 = vmatpush1.msra.mxu0 0.0
      %176 = vmatprep.subr.mxu0 0.0
      %177 = vmatpush1.msra.mxu0 0.0
      %178 = vmatprep.subr.mxu0 0.0
      %179 = vmatpush1.msra.mxu0 0.0
      %180 = vmatprep.subr.mxu0 0.0
      %181 = vmatpush1.msra.mxu0 0.0
      %182 = vmatprep.subr.mxu0 0.0
      %183 = vmatpush1.msra.mxu0 0.0
      %184 = vmatprep.subr.mxu0 0.0
      %185 = vmatpush1.msra.mxu0 0.0
      %186 = vmatprep.subr.mxu0 0.0
      %187 = vmatpush1.msra.mxu0 0.0
      %188 = vmatprep.subr.mxu0 0.0
      %189 = vmatpush1.msra.mxu0 0.0
      %190 = vmatprep.subr.mxu0 0.0
      %191 = vmatpush1.msra.mxu0 0.0
      %192 = vmatprep.subr.mxu0 0.0
      %193 = vmatpush1.msra.mxu0 0.0
      %194 = vmatprep.subr.mxu0 0.0
      %195 = vmatpush1.msra.mxu0 0.0
      %196 = vmatprep.subr.mxu0 0.0
      %197 = vmatpush1.msra.mxu0 0.0
      %198 = vmatprep.subr.mxu0 0.0
      %199 = vmatpush1.msra.mxu0 0.0
      %200 = vmatprep.subr.mxu0 0.0
      %201 = vmatpush1.msra.mxu0 0.0
      %202 = vmatprep.subr.mxu0 0.0
      %203 = vmatpush1.msra.mxu0 0.0
      %204 = vmatprep.subr.mxu0 0.0
      %205 = vmatpush1.msra.mxu0 0.0
      %206 = vmatprep.subr.mxu0 0.0
      %207 = vmatpush1.msra.mxu0 0.0
      %208 = vmatprep.subr.mxu0 0.0
      %209 = vmatpush1.msra.mxu0 0.0
      %210 = vmatprep.mubr.f32.mxu0 0.0
      %211 = vmatmul.mubr.f32.gmra.mrb[0].mxu0 %v63
      %v212 = vpop.f32.mrb[0].mxu0
      %v213 = vadd.f32 %v145, %v212
      %v214 = vpop.f32.mrb[0].mxu0
      %215 = vdwg.mxu0
      %v216 = vtanh.pop %v213
      %v217 = vld [vmem:[%s12] sm:$0xff]
      %v218 = vld [vmem:[%s12 + $0x8] sm:$0xff]
      %v219 = vld [vmem:[%s12 + $0x10] sm:$0xff]
      %v220 = vld [vmem:[%s12 + $0x18] sm:$0xff]
      %v221 = vld [vmem:[%s13] sm:$0x1]
      %v223 = vsel %vm61, %v216, 0
      %225 = vmatprep.subr.mxu0 0.0
      %226 = vmatpush1.msra.mxu0 %v217
      %227 = vmatprep.subr.mxu0 0.0
      %228 = vmatpush1.msra.mxu0 %v218
      %229 = vmatprep.subr.mxu0 0.0
      %230 = vmatpush1.msra.mxu0 %v219
      %231 = vmatprep.subr.mxu0 0.0
      %232 = vmatpush1.msra.mxu0 %v220
      %233 = vmatprep.subr.mxu0 0.0
      %234 = vmatpush1.msra.mxu0 0.0
      %235 = vmatprep.subr.mxu0 0.0
      %236 = vmatpush1.msra.mxu0 0.0
      %237 = vmatprep.subr.mxu0 0.0
      %238 = vmatpush1.msra.mxu0 0.0
      %239 = vmatprep.subr.mxu0 0.0
      %240 = vmatpush1.msra.mxu0 0.0
      %241 = vmatprep.subr.mxu0 0.0
      %242 = vmatpush1.msra.mxu0 0.0
      %243 = vmatprep.subr.mxu0 0.0
      %244 = vmatpush1.msra.mxu0 0.0
      %245 = vmatprep.subr.mxu0 0.0
      %246 = vmatpush1.msra.mxu0 0.0
      %247 = vmatprep.subr.mxu0 0.0
      %248 = vmatpush1.msra.mxu0 0.0
      %249 = vmatprep.subr.mxu0 0.0
      %250 = vmatpush1.msra.mxu0 0.0
      %251 = vmatprep.subr.mxu0 0.0
      %252 = vmatpush1.msra.mxu0 0.0
      %253 = vmatprep.subr.mxu0 0.0
      %254 = vmatpush1.msra.mxu0 0.0
      %255 = vmatprep.subr.mxu0 0.0
      %256 = vmatpush1.msra.mxu0 0.0
      %257 = vmatprep.subr.mxu0 0.0
      %258 = vmatpush1.msra.mxu0 0.0
      %259 = vmatprep.subr.mxu0 0.0
      %260 = vmatpush1.msra.mxu0 0.0
      %261 = vmatprep.subr.mxu0 0.0
      %262 = vmatpush1.msra.mxu0 0.0
      %263 = vmatprep.subr.mxu0 0.0
      %264 = vmatpush1.msra.mxu0 0.0
      %265 = vmatprep.subr.mxu0 0.0
      %266 = vmatpush1.msra.mxu0 0.0
      %267 = vmatprep.subr.mxu0 0.0
      %268 = vmatpush1.msra.mxu0 0.0
      %269 = vmatprep.subr.mxu0 0.0
      %270 = vmatpush1.msra.mxu0 0.0
      %271 = vmatprep.subr.mxu0 0.0
      %272 = vmatpush1.msra.mxu0 0.0
      %273 = vmatprep.subr.mxu0 0.0
      %274 = vmatpush1.msra.mxu0 0.0
      %275 = vmatprep.subr.mxu0 0.0
      %276 = vmatpush1.msra.mxu0 0.0
      %277 = vmatprep.subr.mxu0 0.0
      %278 = vmatpush1.msra.mxu0 0.0
      %279 = vmatprep.subr.mxu0 0.0
      %280 = vmatpush1.msra.mxu0 0.0
      %281 = vmatprep.subr.mxu0 0.0
      %282 = vmatpush1.msra.mxu0 0.0
      %283 = vmatprep.subr.mxu0 0.0
      %284 = vmatpush1.msra.mxu0 0.0
      %285 = vmatprep.subr.mxu0 0.0
      %286 = vmatpush1.msra.mxu0 0.0
      %287 = vmatprep.subr.mxu0 0.0
      %288 = vmatpush1.msra.mxu0 0.0
      %289 = vmatprep.mubr.f32.mxu0 0.0
      %290 = vmatmul.mubr.f32.gmra.mrb[0].mxu0 %v223
      %v291 = vpop.f32.mrb[0].mxu0
      %v292 = vadd.f32 %v221, %v291
      %v293 = vpop.f32.mrb[0].mxu0
      %294 = vdwg.mxu0
      %295 = vst.msk [vmem:[#allocation8] sm:$0x1] %vm135, %v292
    $region61: #{tpu_custom_call.1} parent=1 // pred_fallthru
      _
    %v296 = vld [vmem:[%s1] sm:$0xff]
    %v297 = vld [vmem:[%s1 + $0x8] sm:$0xff]
    %v298 = vld [vmem:[%s1 + $0x10] sm:$0xff]
    %v299 = vld [vmem:[%s1 + $0x18] sm:$0xff]
    %v300 = vld [vmem:[%s1 + $0x20] sm:$0xff]
    %v301 = vld [vmem:[%s1 + $0x28] sm:$0xff]
    %v302 = vld [vmem:[%s1 + $0x30] sm:$0xff]
    %v303 = vld [vmem:[%s1 + $0x38] sm:$0xff]
    %v304 = vld [vmem:[%s1 + $0x40] sm:$0xff]
    %v305 = vld [vmem:[%s1 + $0x48] sm:$0xff]
    %v306 = vld [vmem:[%s1 + $0x50] sm:$0xff]
    %v307 = vld [vmem:[%s1 + $0x58] sm:$0xff]
    %v308 = vld [vmem:[%s1 + $0x60] sm:$0xff]
    %v309 = vld [vmem:[%s1 + $0x68] sm:$0xff]
    %v310 = vld [vmem:[%s1 + $0x70] sm:$0xff]
    %v311 = vld [vmem:[%s1 + $0x78] sm:$0xff]
    %v312 = vld [vmem:[%s1 + $0x80] sm:$0xff]
    %v313 = vld [vmem:[%s1 + $0x88] sm:$0xff]
    %v314 = vld [vmem:[%s1 + $0x90] sm:$0xff]
    %v315 = vld [vmem:[%s1 + $0x98] sm:$0xff]
    %v316 = vld [vmem:[%s1 + $0xa0] sm:$0xff]
    %v317 = vld [vmem:[%s1 + $0xa8] sm:$0xff]
    %v318 = vld [vmem:[%s1 + $0xb0] sm:$0xff]
    %v319 = vld [vmem:[%s1 + $0xb8] sm:$0xff]
    %v320 = vld [vmem:[%s3] sm:$0xff]
    %v321 = vld [vmem:[%s3 + $0x8] sm:$0xff]
    %v322 = vld [vmem:[%s3 + $0x10] sm:$0xff]
    %v323 = vld [vmem:[%s3 + $0x18] sm:$0xff]
    %v324 = vld [vmem:[#allocation2] sm:$0x1]
    %v326 = vlaneseq
    %v327 = vshrl.u32 %v326, 7
    %v328 = vsub.s32 0, %v327
    %v329 = vrot.slane %v324, %v328
    %vm331 = vcmask 261120
    %v333 = vsel %vm331, %v296, 0
    %v336 = vsel %vm331, %v297, 0
    %v339 = vsel %vm331, %v298, 0
    %v342 = vsel %vm331, %v299, 0
    %v345 = vsel %vm331, %v300, 0
    %v348 = vsel %vm331, %v301, 0
    %v351 = vsel %vm331, %v302, 0
    %v354 = vsel %vm331, %v303, 0
    %v357 = vsel %vm331, %v304, 0
    %v360 = vsel %vm331, %v305, 0
    %v363 = vsel %vm331, %v306, 0
    %v366 = vsel %vm331, %v307, 0
    %v369 = vsel %vm331, %v308, 0
    %v372 = vsel %vm331, %v309, 0
    %v375 = vsel %vm331, %v310, 0
    %v378 = vsel %vm331, %v311, 0
    %v381 = vsel %vm331, %v312, 0
    %v384 = vsel %vm331, %v313, 0
    %v387 = vsel %vm331, %v314, 0
    %v390 = vsel %vm331, %v315, 0
    %v393 = vsel %vm331, %v316, 0
    %v396 = vsel %vm331, %v317, 0
    %v399 = vsel %vm331, %v318, 0
    %v402 = vsel %vm331, %v319, 0
    %404 = vmatprep.subr.mxu0 0.0
    %405 = vmatpush1.msra.mxu0 %v320
    %406 = vmatprep.subr.mxu0 0.0
    %407 = vmatpush1.msra.mxu0 %v321
    %408 = vmatprep.subr.mxu0 0.0
    %409 = vmatpush1.msra.mxu0 %v322
    %410 = vmatprep.subr.mxu0 0.0
    %411 = vmatpush1.msra.mxu0 %v323
    %412 = vmatprep.subr.mxu0 0.0
    %413 = vmatpush1.msra.mxu0 0.0
    %414 = vmatprep.subr.mxu0 0.0
    %415 = vmatpush1.msra.mxu0 0.0
    %416 = vmatprep.subr.mxu0 0.0
    %417 = vmatpush1.msra.mxu0 0.0
    %418 = vmatprep.subr.mxu0 0.0
    %419 = vmatpush1.msra.mxu0 0.0
    %420 = vmatprep.subr.mxu0 0.0
    %421 = vmatpush1.msra.mxu0 0.0
    %422 = vmatprep.subr.mxu0 0.0
    %423 = vmatpush1.msra.mxu0 0.0
    %424 = vmatprep.subr.mxu0 0.0
    %425 = vmatpush1.msra.mxu0 0.0
    %426 = vmatprep.subr.mxu0 0.0
    %427 = vmatpush1.msra.mxu0 0.0
    %428 = vmatprep.subr.mxu0 0.0
    %429 = vmatpush1.msra.mxu0 0.0
    %430 = vmatprep.subr.mxu0 0.0
    %431 = vmatpush1.msra.mxu0 0.0
    %432 = vmatprep.subr.mxu0 0.0
    %433 = vmatpush1.msra.mxu0 0.0
    %434 = vmatprep.subr.mxu0 0.0
    %435 = vmatpush1.msra.mxu0 0.0
    %436 = vmatprep.subr.mxu0 0.0
    %437 = vmatpush1.msra.mxu0 0.0
    %438 = vmatprep.subr.mxu0 0.0
    %439 = vmatpush1.msra.mxu0 0.0
    %440 = vmatprep.subr.mxu0 0.0
    %441 = vmatpush1.msra.mxu0 0.0
    %442 = vmatprep.subr.mxu0 0.0
    %443 = vmatpush1.msra.mxu0 0.0
    %444 = vmatprep.subr.mxu0 0.0
    %445 = vmatpush1.msra.mxu0 0.0
    %446 = vmatprep.subr.mxu0 0.0
    %447 = vmatpush1.msra.mxu0 0.0
    %448 = vmatprep.subr.mxu0 0.0
    %449 = vmatpush1.msra.mxu0 0.0
    %450 = vmatprep.subr.mxu0 0.0
    %451 = vmatpush1.msra.mxu0 0.0
    %452 = vmatprep.subr.mxu0 0.0
    %453 = vmatpush1.msra.mxu0 0.0
    %454 = vmatprep.subr.mxu0 0.0
    %455 = vmatpush1.msra.mxu0 0.0
    %456 = vmatprep.subr.mxu0 0.0
    %457 = vmatpush1.msra.mxu0 0.0
    %458 = vmatprep.subr.mxu0 0.0
    %459 = vmatpush1.msra.mxu0 0.0
    %460 = vmatprep.subr.mxu0 0.0
    %461 = vmatpush1.msra.mxu0 0.0
    %462 = vmatprep.subr.mxu0 0.0
    %463 = vmatpush1.msra.mxu0 0.0
    %464 = vmatprep.subr.mxu0 0.0
    %465 = vmatpush1.msra.mxu0 0.0
    %466 = vmatprep.subr.mxu0 0.0
    %467 = vmatpush1.msra.mxu0 0.0
    %468 = vmatprep.mubr.f32.mxu0 0.0
    %469 = vmatmul.mubr.f32.gmra.mrb[0].mxu0 %v333
    %v470 = vpop.f32.mrb[0].mxu0
    %v471 = vadd.f32 %v329, %v470
    %v472 = vpop.f32.mrb[0].mxu0
    %473 = vmatprep.mubr.f32.mxu0 0.0
    %474 = vmatmul.mubr.f32.gmra.mrb[0].mxu0 %v336
    %v475 = vpop.f32.mrb[0].mxu0
    %v476 = vadd.f32 %v329, %v475
    %v477 = vpop.f32.mrb[0].mxu0
    %478 = vmatprep.mubr.f32.mxu0 0.0
    %479 = vmatmul.mubr.f32.gmra.mrb[0].mxu0 %v339
    %v480 = vpop.f32.mrb[0].mxu0
    %v481 = vadd.f32 %v329, %v480
    %v482 = vpop.f32.mrb[0].mxu0
    %483 = vmatprep.mubr.f32.mxu0 0.0
    %484 = vmatmul.mubr.f32.gmra.mrb[0].mxu0 %v342
    %v485 = vpop.f32.mrb[0].mxu0
    %v486 = vadd.f32 %v329, %v485
    %v487 = vpop.f32.mrb[0].mxu0
    %488 = vmatprep.mubr.f32.mxu0 0.0
    %489 = vmatmul.mubr.f32.gmra.mrb[0].mxu0 %v345
    %v490 = vpop.f32.mrb[0].mxu0
    %v491 = vadd.f32 %v329, %v490
    %v492 = vpop.f32.mrb[0].mxu0
    %493 = vmatprep.mubr.f32.mxu0 0.0
    %494 = vmatmul.mubr.f32.gmra.mrb[0].mxu0 %v348
    %v495 = vpop.f32.mrb[0].mxu0
    %v496 = vadd.f32 %v329, %v495
    %v497 = vpop.f32.mrb[0].mxu0
    %498 = vmatprep.mubr.f32.mxu0 0.0
    %499 = vmatmul.mubr.f32.gmra.mrb[0].mxu0 %v351
    %v500 = vpop.f32.mrb[0].mxu0
    %v501 = vadd.f32 %v329, %v500
    %v502 = vpop.f32.mrb[0].mxu0
    %503 = vmatprep.mubr.f32.mxu0 0.0
    %504 = vmatmul.mubr.f32.gmra.mrb[0].mxu0 %v354
    %v505 = vpop.f32.mrb[0].mxu0
    %v506 = vadd.f32 %v329, %v505
    %v507 = vpop.f32.mrb[0].mxu0
    %508 = vmatprep.mubr.f32.mxu0 0.0
    %509 = vmatmul.mubr.f32.gmra.mrb[0].mxu0 %v357
    %v510 = vpop.f32.mrb[0].mxu0
    %v511 = vadd.f32 %v329, %v510
    %v512 = vpop.f32.mrb[0].mxu0
    %513 = vmatprep.mubr.f32.mxu0 0.0
    %514 = vmatmul.mubr.f32.gmra.mrb[0].mxu0 %v360
    %v515 = vpop.f32.mrb[0].mxu0
    %v516 = vadd.f32 %v329, %v515
    %v517 = vpop.f32.mrb[0].mxu0
    %518 = vmatprep.mubr.f32.mxu0 0.0
    %519 = vmatmul.mubr.f32.gmra.mrb[0].mxu0 %v363
    %v520 = vpop.f32.mrb[0].mxu0
    %v521 = vadd.f32 %v329, %v520
    %v522 = vpop.f32.mrb[0].mxu0
    %523 = vmatprep.mubr.f32.mxu0 0.0
    %524 = vmatmul.mubr.f32.gmra.mrb[0].mxu0 %v366
    %v525 = vpop.f32.mrb[0].mxu0
    %v526 = vadd.f32 %v329, %v525
    %v527 = vpop.f32.mrb[0].mxu0
    %528 = vmatprep.mubr.f32.mxu0 0.0
    %529 = vmatmul.mubr.f32.gmra.mrb[0].mxu0 %v369
    %v530 = vpop.f32.mrb[0].mxu0
    %v531 = vadd.f32 %v329, %v530
    %v532 = vpop.f32.mrb[0].mxu0
    %533 = vmatprep.mubr.f32.mxu0 0.0
    %534 = vmatmul.mubr.f32.gmra.mrb[0].mxu0 %v372
    %v535 = vpop.f32.mrb[0].mxu0
    %v536 = vadd.f32 %v329, %v535
    %v537 = vpop.f32.mrb[0].mxu0
    %538 = vmatprep.mubr.f32.mxu0 0.0
    %539 = vmatmul.mubr.f32.gmra.mrb[0].mxu0 %v375
    %v540 = vpop.f32.mrb[0].mxu0
    %v541 = vadd.f32 %v329, %v540
    %v542 = vpop.f32.mrb[0].mxu0
    %543 = vmatprep.mubr.f32.mxu0 0.0
    %544 = vmatmul.mubr.f32.gmra.mrb[0].mxu0 %v378
    %v545 = vpop.f32.mrb[0].mxu0
    %v546 = vadd.f32 %v329, %v545
    %v547 = vpop.f32.mrb[0].mxu0
    %548 = vmatprep.mubr.f32.mxu0 0.0
    %549 = vmatmul.mubr.f32.gmra.mrb[0].mxu0 %v381
    %v550 = vpop.f32.mrb[0].mxu0
    %v551 = vadd.f32 %v329, %v550
    %v552 = vpop.f32.mrb[0].mxu0
    %553 = vmatprep.mubr.f32.mxu0 0.0
    %554 = vmatmul.mubr.f32.gmra.mrb[0].mxu0 %v384
    %v555 = vpop.f32.mrb[0].mxu0
    %v556 = vadd.f32 %v329, %v555
    %v557 = vpop.f32.mrb[0].mxu0
    %558 = vmatprep.mubr.f32.mxu0 0.0
    %559 = vmatmul.mubr.f32.gmra.mrb[0].mxu0 %v387
    %v560 = vpop.f32.mrb[0].mxu0
    %v561 = vadd.f32 %v329, %v560
    %v562 = vpop.f32.mrb[0].mxu0
    %563 = vmatprep.mubr.f32.mxu0 0.0
    %564 = vmatmul.mubr.f32.gmra.mrb[0].mxu0 %v390
    %v565 = vpop.f32.mrb[0].mxu0
    %v566 = vadd.f32 %v329, %v565
    %v567 = vpop.f32.mrb[0].mxu0
    %568 = vmatprep.mubr.f32.mxu0 0.0
    %569 = vmatmul.mubr.f32.gmra.mrb[0].mxu0 %v393
    %v570 = vpop.f32.mrb[0].mxu0
    %v571 = vadd.f32 %v329, %v570
    %v572 = vpop.f32.mrb[0].mxu0
    %573 = vmatprep.mubr.f32.mxu0 0.0
    %574 = vmatmul.mubr.f32.gmra.mrb[0].mxu0 %v396
    %v575 = vpop.f32.mrb[0].mxu0
    %v576 = vadd.f32 %v329, %v575
    %v577 = vpop.f32.mrb[0].mxu0
    %578 = vmatprep.mubr.f32.mxu0 0.0
    %579 = vmatmul.mubr.f32.gmra.mrb[0].mxu0 %v399
    %v580 = vpop.f32.mrb[0].mxu0
    %v581 = vadd.f32 %v329, %v580
    %v582 = vpop.f32.mrb[0].mxu0
    %583 = vmatprep.mubr.f32.mxu0 0.0
    %584 = vmatmul.mubr.f32.gmra.mrb[0].mxu0 %v402
    %v585 = vpop.f32.mrb[0].mxu0
    %v586 = vadd.f32 %v329, %v585
    %v587 = vpop.f32.mrb[0].mxu0
    %588 = vdwg.mxu0
    %v589 = vtanh.pop %v471
    %v590 = vtanh.pop %v476
    %v591 = vtanh.pop %v481
    %v592 = vtanh.pop %v486
    %v593 = vtanh.pop %v491
    %v594 = vtanh.pop %v496
    %v595 = vtanh.pop %v501
    %v596 = vtanh.pop %v506
    %v597 = vtanh.pop %v511
    %v598 = vtanh.pop %v516
    %v599 = vtanh.pop %v521
    %v600 = vtanh.pop %v526
    %v601 = vtanh.pop %v531
    %v602 = vtanh.pop %v536
    %v603 = vtanh.pop %v541
    %v604 = vtanh.pop %v546
    %v605 = vtanh.pop %v551
    %v606 = vtanh.pop %v556
    %v607 = vtanh.pop %v561
    %v608 = vtanh.pop %v566
    %v609 = vtanh.pop %v571
    %v610 = vtanh.pop %v576
    %v611 = vtanh.pop %v581
    %v612 = vtanh.pop %v586
    %v613 = vld [vmem:[%s5] sm:$0x1]
    %v615 = vlaneseq
    %v616 = vshrl.u32 %v615, 7
    %v617 = vsub.s32 0, %v616
    %v618 = vrot.slane %v613, %v617
    %v620 = vmul.f32 %v589, %v618
    %v621 = vmul.f32 %v590, %v618
    %v622 = vmul.f32 %v591, %v618
    %v623 = vmul.f32 %v592, %v618
    %v624 = vmul.f32 %v593, %v618
    %v625 = vmul.f32 %v594, %v618
    %v626 = vmul.f32 %v595, %v618
    %v627 = vmul.f32 %v596, %v618
    %v628 = vmul.f32 %v597, %v618
    %v629 = vmul.f32 %v598, %v618
    %v630 = vmul.f32 %v599, %v618
    %v631 = vmul.f32 %v600, %v618
    %v632 = vmul.f32 %v601, %v618
    %v633 = vmul.f32 %v602, %v618
    %v634 = vmul.f32 %v603, %v618
    %v635 = vmul.f32 %v604, %v618
    %v636 = vmul.f32 %v605, %v618
    %v637 = vmul.f32 %v606, %v618
    %v638 = vmul.f32 %v607, %v618
    %v639 = vmul.f32 %v608, %v618
    %v640 = vmul.f32 %v609, %v618
    %v641 = vmul.f32 %v610, %v618
    %v642 = vmul.f32 %v611, %v618
    %v643 = vmul.f32 %v612, %v618
    %v644 = vsel %vm331, %v620, 0.0
    %645 = vadd.xlane.f32.xlu0 %v644
    %v646 = vpop.xlane.xlu0 %645
    %v647 = vsel %vm331, %v621, 0.0
    %648 = vadd.xlane.f32.xlu0 %v647
    %v649 = vpop.xlane.xlu0 %648
    %v650 = vsel %vm331, %v622, 0.0
    %651 = vadd.xlane.f32.xlu0 %v650
    %v652 = vpop.xlane.xlu0 %651
    %v653 = vsel %vm331, %v623, 0.0
    %654 = vadd.xlane.f32.xlu0 %v653
    %v655 = vpop.xlane.xlu0 %654
    %v656 = vsel %vm331, %v624, 0.0
    %657 = vadd.xlane.f32.xlu0 %v656
    %v658 = vpop.xlane.xlu0 %657
    %v659 = vsel %vm331, %v625, 0.0
    %660 = vadd.xlane.f32.xlu0 %v659
    %v661 = vpop.xlane.xlu0 %660
    %v662 = vsel %vm331, %v626, 0.0
    %663 = vadd.xlane.f32.xlu0 %v662
    %v664 = vpop.xlane.xlu0 %663
    %v665 = vsel %vm331, %v627, 0.0
    %666 = vadd.xlane.f32.xlu0 %v665
    %v667 = vpop.xlane.xlu0 %666
    %v668 = vsel %vm331, %v628, 0.0
    %669 = vadd.xlane.f32.xlu0 %v668
    %v670 = vpop.xlane.xlu0 %669
    %v671 = vsel %vm331, %v629, 0.0
    %672 = vadd.xlane.f32.xlu0 %v671
    %v673 = vpop.xlane.xlu0 %672
    %v674 = vsel %vm331, %v630, 0.0
    %675 = vadd.xlane.f32.xlu0 %v674
    %v676 = vpop.xlane.xlu0 %675
    %v677 = vsel %vm331, %v631, 0.0
    %678 = vadd.xlane.f32.xlu0 %v677
    %v679 = vpop.xlane.xlu0 %678
    %v680 = vsel %vm331, %v632, 0.0
    %681 = vadd.xlane.f32.xlu0 %v680
    %v682 = vpop.xlane.xlu0 %681
    %v683 = vsel %vm331, %v633, 0.0
    %684 = vadd.xlane.f32.xlu0 %v683
    %v685 = vpop.xlane.xlu0 %684
    %v686 = vsel %vm331, %v634, 0.0
    %687 = vadd.xlane.f32.xlu0 %v686
    %v688 = vpop.xlane.xlu0 %687
    %v689 = vsel %vm331, %v635, 0.0
    %690 = vadd.xlane.f32.xlu0 %v689
    %v691 = vpop.xlane.xlu0 %690
    %v692 = vsel %vm331, %v636, 0.0
    %693 = vadd.xlane.f32.xlu0 %v692
    %v694 = vpop.xlane.xlu0 %693
    %v695 = vsel %vm331, %v637, 0.0
    %696 = vadd.xlane.f32.xlu0 %v695
    %v697 = vpop.xlane.xlu0 %696
    %v698 = vsel %vm331, %v638, 0.0
    %699 = vadd.xlane.f32.xlu0 %v698
    %v700 = vpop.xlane.xlu0 %699
    %v701 = vsel %vm331, %v639, 0.0
    %702 = vadd.xlane.f32.xlu0 %v701
    %v703 = vpop.xlane.xlu0 %702
    %v704 = vsel %vm331, %v640, 0.0
    %705 = vadd.xlane.f32.xlu0 %v704
    %v706 = vpop.xlane.xlu0 %705
    %v707 = vsel %vm331, %v641, 0.0
    %708 = vadd.xlane.f32.xlu0 %v707
    %v709 = vpop.xlane.xlu0 %708
    %v710 = vsel %vm331, %v642, 0.0
    %711 = vadd.xlane.f32.xlu0 %v710
    %v712 = vpop.xlane.xlu0 %711
    %v713 = vsel %vm331, %v643, 0.0
    %714 = vadd.xlane.f32.xlu0 %v713
    %v715 = vpop.xlane.xlu0 %714
    %v716 = vld [vmem:[#allocation4] sm:$0x1]
    %v717 = vmax.f32 %v646, %v658
    %v718 = vmax.f32 %v649, %v661
    %v719 = vmax.f32 %v652, %v664
    %v720 = vmax.f32 %v655, %v667
    %v721 = vmax.f32 %v717, %v670
    %v722 = vmax.f32 %v718, %v673
    %v723 = vmax.f32 %v719, %v676
    %v724 = vmax.f32 %v720, %v679
    %v725 = vmax.f32 %v721, %v682
    %v726 = vmax.f32 %v722, %v685
    %v727 = vmax.f32 %v723, %v688
    %v728 = vmax.f32 %v724, %v691
    %v729 = vmax.f32 %v725, %v694
    %v730 = vmax.f32 %v726, %v697
    %v731 = vmax.f32 %v727, %v700
    %v732 = vmax.f32 %v728, %v703
    %v733 = vmax.f32 %v729, %v706
    %v734 = vmax.f32 %v730, %v709
    %v735 = vmax.f32 %v731, %v712
    %v736 = vmax.f32 %v732, %v715
    %v737 = vmax.f32 %v733, %v734
    %v738 = vmax.f32 %v735, %v736
    %v739 = vmax.f32 %v737, %v738
    %v740 = vrot.slane %v739, 4
    %v741 = vmax.f32 %v739, %v740
    %v742 = vrot.slane %v741, 2
    %v743 = vmax.f32 %v741, %v742
    %v744 = vrot.slane %v743, 1
    %v745 = vmax.f32 %v743, %v744
    %v746 = vmax.f32 %v716, %v745
    %v747 = vsub.f32 %v716, %v746
    %v748 = vmul.f32 %v747, 1.442695
    %v749 = vpow.pop %v748
    %v751 = vlaneseq
    %v752 = vshrl.u32 %v751, 7
    %v753 = vsub.s32 0, %v752
    %v754 = vrot.slane %v746, %v753
    %v756 = vsub.f32 %v646, %v754
    %v757 = vsub.f32 %v649, %v754
    %v758 = vsub.f32 %v652, %v754
    %v759 = vsub.f32 %v655, %v754
    %v760 = vsub.f32 %v658, %v754
    %v761 = vsub.f32 %v661, %v754
    %v762 = vsub.f32 %v664, %v754
    %v763 = vsub.f32 %v667, %v754
    %v764 = vsub.f32 %v670, %v754
    %v765 = vsub.f32 %v673, %v754
    %v766 = vsub.f32 %v676, %v754
    %v767 = vsub.f32 %v679, %v754
    %v768 = vsub.f32 %v682, %v754
    %v769 = vsub.f32 %v685, %v754
    %v770 = vsub.f32 %v688, %v754
    %v771 = vsub.f32 %v691, %v754
    %v772 = vsub.f32 %v694, %v754
    %v773 = vsub.f32 %v697, %v754
    %v774 = vsub.f32 %v700, %v754
    %v775 = vsub.f32 %v703, %v754
    %v776 = vsub.f32 %v706, %v754
    %v777 = vsub.f32 %v709, %v754
    %v778 = vsub.f32 %v712, %v754
    %v779 = vsub.f32 %v715, %v754
    %v780 = vmul.f32 %v756, 1.442695
    %v781 = vpow.pop %v780
    %v782 = vmul.f32 %v757, 1.442695
    %v783 = vpow.pop %v782
    %v784 = vmul.f32 %v758, 1.442695
    %v785 = vpow.pop %v784
    %v786 = vmul.f32 %v759, 1.442695
    %v787 = vpow.pop %v786
    %v788 = vmul.f32 %v760, 1.442695
    %v789 = vpow.pop %v788
    %v790 = vmul.f32 %v761, 1.442695
    %v791 = vpow.pop %v790
    %v792 = vmul.f32 %v762, 1.442695
    %v793 = vpow.pop %v792
    %v794 = vmul.f32 %v763, 1.442695
    %v795 = vpow.pop %v794
    %v796 = vmul.f32 %v764, 1.442695
    %v797 = vpow.pop %v796
    %v798 = vmul.f32 %v765, 1.442695
    %v799 = vpow.pop %v798
    %v800 = vmul.f32 %v766, 1.442695
    %v801 = vpow.pop %v800
    %v802 = vmul.f32 %v767, 1.442695
    %v803 = vpow.pop %v802
    %v804 = vmul.f32 %v768, 1.442695
    %v805 = vpow.pop %v804
    %v806 = vmul.f32 %v769, 1.442695
    %v807 = vpow.pop %v806
    %v808 = vmul.f32 %v770, 1.442695
    %v809 = vpow.pop %v808
    %v810 = vmul.f32 %v771, 1.442695
    %v811 = vpow.pop %v810
    %v812 = vmul.f32 %v772, 1.442695
    %v813 = vpow.pop %v812
    %v814 = vmul.f32 %v773, 1.442695
    %v815 = vpow.pop %v814
    %v816 = vmul.f32 %v774, 1.442695
    %v817 = vpow.pop %v816
    %v818 = vmul.f32 %v775, 1.442695
    %v819 = vpow.pop %v818
    %v820 = vmul.f32 %v776, 1.442695
    %v821 = vpow.pop %v820
    %v822 = vmul.f32 %v777, 1.442695
    %v823 = vpow.pop %v822
    %v824 = vmul.f32 %v778, 1.442695
    %v825 = vpow.pop %v824
    %v826 = vmul.f32 %v779, 1.442695
    %v827 = vpow.pop %v826
    %v828 = vld [vmem:[#allocation5] sm:$0x1]
    %v829 = vmul.f32 %v749, %v828
    %vm830 = vcmask 7168
    %v831 = vsel %vm830, %v781, 0.0
    %v832 = vsel %vm830, %v783, 0.0
    %v833 = vadd.f32 %v831, %v832
    %v834 = vsel %vm830, %v785, 0.0
    %v835 = vadd.f32 %v833, %v834
    %v836 = vsel %vm830, %v787, 0.0
    %v837 = vadd.f32 %v835, %v836
    %v838 = vsel %vm830, %v789, 0.0
    %v839 = vadd.f32 %v837, %v838
    %v840 = vsel %vm830, %v791, 0.0
    %v841 = vadd.f32 %v839, %v840
    %v842 = vsel %vm830, %v793, 0.0
    %v843 = vadd.f32 %v841, %v842
    %v844 = vsel %vm830, %v795, 0.0
    %v845 = vadd.f32 %v843, %v844
    %v846 = vsel %vm830, %v797, 0.0
    %v847 = vadd.f32 %v845, %v846
    %v848 = vsel %vm830, %v799, 0.0
    %v849 = vadd.f32 %v847, %v848
    %v850 = vsel %vm830, %v801, 0.0
    %v851 = vadd.f32 %v849, %v850
    %v852 = vsel %vm830, %v803, 0.0
    %v853 = vadd.f32 %v851, %v852
    %v854 = vsel %vm830, %v805, 0.0
    %v855 = vadd.f32 %v853, %v854
    %v856 = vsel %vm830, %v807, 0.0
    %v857 = vadd.f32 %v855, %v856
    %v858 = vsel %vm830, %v809, 0.0
    %v859 = vadd.f32 %v857, %v858
    %v860 = vsel %vm830, %v811, 0.0
    %v861 = vadd.f32 %v859, %v860
    %v862 = vsel %vm830, %v813, 0.0
    %v863 = vadd.f32 %v861, %v862
    %v864 = vsel %vm830, %v815, 0.0
    %v865 = vadd.f32 %v863, %v864
    %v866 = vsel %vm830, %v817, 0.0
    %v867 = vadd.f32 %v865, %v866
    %v868 = vsel %vm830, %v819, 0.0
    %v869 = vadd.f32 %v867, %v868
    %v870 = vsel %vm830, %v821, 0.0
    %v871 = vadd.f32 %v869, %v870
    %v872 = vsel %vm830, %v823, 0.0
    %v873 = vadd.f32 %v871, %v872
    %v874 = vsel %vm830, %v825, 0.0
    %v875 = vadd.f32 %v873, %v874
    %v876 = vsel %vm830, %v827, 0.0
    %v877 = vadd.f32 %v875, %v876
    %v878 = vrot.slane %v877, 4
    %v879 = vadd.f32 %v877, %v878
    %v880 = vrot.slane %v879, 2
    %v881 = vadd.f32 %v879, %v880
    %v882 = vrot.slane %v881, 1
    %v883 = vadd.f32 %v881, %v882
    %v884 = vadd.f32 %v829, %v883
    %vm885 = vcmask 0
    %886 = vst.msk [vmem:[#allocation5] sm:$0x1] %vm885, %v884
    %v887 = vld [vmem:[#allocation3] sm:$0x1]
    %889 = vset.pattern.permute.xlu0 0
    %890 = vperm.xlu0 %889, %v749
    %v891 = vpop.permute.xlu0 %890
    %v893 = vlaneseq
    %v894 = vshrl.u32 %v893, 7
    %v895 = vsub.s32 0, %v894
    %v896 = vrot.slane %v891, %v895
    %v897 = vmul.f32 %v896, %v887
    %899 = vset.pattern.permute.xlu0 0
    %900 = vperm.xlu0 %899, %v781
    %v901 = vpop.permute.xlu0 %900
    %904 = vset.pattern.permute.xlu0 0
    %905 = vperm.xlu0 %904, %v783
    %v906 = vpop.permute.xlu0 %905
    %909 = vset.pattern.permute.xlu0 0
    %910 = vperm.xlu0 %909, %v785
    %v911 = vpop.permute.xlu0 %910
    %914 = vset.pattern.permute.xlu0 0
    %915 = vperm.xlu0 %914, %v787
    %v916 = vpop.permute.xlu0 %915
    %919 = vset.pattern.permute.xlu0 0
    %920 = vperm.xlu0 %919, %v789
    %v921 = vpop.permute.xlu0 %920
    %924 = vset.pattern.permute.xlu0 0
    %925 = vperm.xlu0 %924, %v791
    %v926 = vpop.permute.xlu0 %925
    %929 = vset.pattern.permute.xlu0 0
    %930 = vperm.xlu0 %929, %v793
    %v931 = vpop.permute.xlu0 %930
    %934 = vset.pattern.permute.xlu0 0
    %935 = vperm.xlu0 %934, %v795
    %v936 = vpop.permute.xlu0 %935
    %939 = vset.pattern.permute.xlu0 0
    %940 = vperm.xlu0 %939, %v797
    %v941 = vpop.permute.xlu0 %940
    %944 = vset.pattern.permute.xlu0 0
    %945 = vperm.xlu0 %944, %v799
    %v946 = vpop.permute.xlu0 %945
    %949 = vset.pattern.permute.xlu0 0
    %950 = vperm.xlu0 %949, %v801
    %v951 = vpop.permute.xlu0 %950
    %954 = vset.pattern.permute.xlu0 0
    %955 = vperm.xlu0 %954, %v803
    %v956 = vpop.permute.xlu0 %955
    %959 = vset.pattern.permute.xlu0 0
    %960 = vperm.xlu0 %959, %v805
    %v961 = vpop.permute.xlu0 %960
    %964 = vset.pattern.permute.xlu0 0
    %965 = vperm.xlu0 %964, %v807
    %v966 = vpop.permute.xlu0 %965
    %969 = vset.pattern.permute.xlu0 0
    %970 = vperm.xlu0 %969, %v809
    %v971 = vpop.permute.xlu0 %970
    %974 = vset.pattern.permute.xlu0 0
    %975 = vperm.xlu0 %974, %v811
    %v976 = vpop.permute.xlu0 %975
    %979 = vset.pattern.permute.xlu0 0
    %980 = vperm.xlu0 %979, %v813
    %v981 = vpop.permute.xlu0 %980
    %984 = vset.pattern.permute.xlu0 0
    %985 = vperm.xlu0 %984, %v815
    %v986 = vpop.permute.xlu0 %985
    %989 = vset.pattern.permute.xlu0 0
    %990 = vperm.xlu0 %989, %v817
    %v991 = vpop.permute.xlu0 %990
    %994 = vset.pattern.permute.xlu0 0
    %995 = vperm.xlu0 %994, %v819
    %v996 = vpop.permute.xlu0 %995
    %999 = vset.pattern.permute.xlu0 0
    %1000 = vperm.xlu0 %999, %v821
    %v1001 = vpop.permute.xlu0 %1000
    %1004 = vset.pattern.permute.xlu0 0
    %1005 = vperm.xlu0 %1004, %v823
    %v1006 = vpop.permute.xlu0 %1005
    %1009 = vset.pattern.permute.xlu0 0
    %1010 = vperm.xlu0 %1009, %v825
    %v1011 = vpop.permute.xlu0 %1010
    %1014 = vset.pattern.permute.xlu0 0
    %1015 = vperm.xlu0 %1014, %v827
    %v1016 = vpop.permute.xlu0 %1015
    %v1018 = vmul.f32 %v901, %v296
    %v1019 = vmul.f32 %v906, %v297
    %v1020 = vmul.f32 %v911, %v298
    %v1021 = vmul.f32 %v916, %v299
    %v1022 = vmul.f32 %v921, %v300
    %v1023 = vmul.f32 %v926, %v301
    %v1024 = vmul.f32 %v931, %v302
    %v1025 = vmul.f32 %v936, %v303
    %v1026 = vmul.f32 %v941, %v304
    %v1027 = vmul.f32 %v946, %v305
    %v1028 = vmul.f32 %v951, %v306
    %v1029 = vmul.f32 %v956, %v307
    %v1030 = vmul.f32 %v961, %v308
    %v1031 = vmul.f32 %v966, %v309
    %v1032 = vmul.f32 %v971, %v310
    %v1033 = vmul.f32 %v976, %v311
    %v1034 = vmul.f32 %v981, %v312
    %v1035 = vmul.f32 %v986, %v313
    %v1036 = vmul.f32 %v991, %v314
    %v1037 = vmul.f32 %v996, %v315
    %v1038 = vmul.f32 %v1001, %v316
    %v1039 = vmul.f32 %v1006, %v317
    %v1040 = vmul.f32 %v1011, %v318
    %v1041 = vmul.f32 %v1016, %v319
    %v1042 = vsel %vm331, %v1018, 0.0
    %v1043 = vsel %vm331, %v1019, 0.0
    %v1044 = vadd.f32 %v1042, %v1043
    %v1045 = vsel %vm331, %v1020, 0.0
    %v1046 = vadd.f32 %v1044, %v1045
    %v1047 = vsel %vm331, %v1021, 0.0
    %v1048 = vadd.f32 %v1046, %v1047
    %v1049 = vsel %vm331, %v1022, 0.0
    %v1050 = vadd.f32 %v1048, %v1049
    %v1051 = vsel %vm331, %v1023, 0.0
    %v1052 = vadd.f32 %v1050, %v1051
    %v1053 = vsel %vm331, %v1024, 0.0
    %v1054 = vadd.f32 %v1052, %v1053
    %v1055 = vsel %vm331, %v1025, 0.0
    %v1056 = vadd.f32 %v1054, %v1055
    %v1057 = vsel %vm331, %v1026, 0.0
    %v1058 = vadd.f32 %v1056, %v1057
    %v1059 = vsel %vm331, %v1027, 0.0
    %v1060 = vadd.f32 %v1058, %v1059
    %v1061 = vsel %vm331, %v1028, 0.0
    %v1062 = vadd.f32 %v1060, %v1061
    %v1063 = vsel %vm331, %v1029, 0.0
    %v1064 = vadd.f32 %v1062, %v1063
    %v1065 = vsel %vm331, %v1030, 0.0
    %v1066 = vadd.f32 %v1064, %v1065
    %v1067 = vsel %vm331, %v1031, 0.0
    %v1068 = vadd.f32 %v1066, %v1067
    %v1069 = vsel %vm331, %v1032, 0.0
    %v1070 = vadd.f32 %v1068, %v1069
    %v1071 = vsel %vm331, %v1033, 0.0
    %v1072 = vadd.f32 %v1070, %v1071
    %v1073 = vsel %vm331, %v1034, 0.0
    %v1074 = vadd.f32 %v1072, %v1073
    %v1075 = vsel %vm331, %v1035, 0.0
    %v1076 = vadd.f32 %v1074, %v1075
    %v1077 = vsel %vm331, %v1036, 0.0
    %v1078 = vadd.f32 %v1076, %v1077
    %v1079 = vsel %vm331, %v1037, 0.0
    %v1080 = vadd.f32 %v1078, %v1079
    %v1081 = vsel %vm331, %v1038, 0.0
    %v1082 = vadd.f32 %v1080, %v1081
    %v1083 = vsel %vm331, %v1039, 0.0
    %v1084 = vadd.f32 %v1082, %v1083
    %v1085 = vsel %vm331, %v1040, 0.0
    %v1086 = vadd.f32 %v1084, %v1085
    %v1087 = vsel %vm331, %v1041, 0.0
    %v1088 = vadd.f32 %v1086, %v1087
    %v1089 = vrot.slane %v1088, 4
    %v1090 = vadd.f32 %v1088, %v1089
    %v1091 = vrot.slane %v1090, 2
    %v1092 = vadd.f32 %v1090, %v1091
    %v1093 = vrot.slane %v1092, 1
    %v1094 = vadd.f32 %v1092, %v1093
    %v1095 = vadd.f32 %v897, %v1094
    %vm1096 = vcmask 253952
    %1097 = vst.msk [vmem:[#allocation3] sm:$0x1] %vm1096, %v1095
    %1098 = vst.msk [vmem:[#allocation4] sm:$0x1] %vm885, %v746
    // Predicated region
    $region62: #{tpu_custom_call.1} parent=1 // pred_check
      %p1099 = pneg %p51
    $region63: #{tpu_custom_call.1} parent=1 // pred_check_branch
      %1101 = sbr.rel (%p1099) target = $region65
    $region64: #{tpu_custom_call.1} parent=1 // pred_region
      %v1102 = vld [vmem:[#allocation3] sm:$0x1]
      %v1103 = vld [vmem:[#allocation5] sm:$0x1]
      %1105 = vset.pattern.permute.xlu0 0
      %1106 = vperm.xlu0 %1105, %v1103
      %v1107 = vpop.permute.xlu0 %1106
      %v1109 = vlaneseq
      %v1110 = vshrl.u32 %v1109, 7
      %v1111 = vsub.s32 0, %v1110
      %v1112 = vrot.slane %v1107, %v1111
      %v1113 = vrcp.pop %v1112
      %v1114 = vmul.f32 %v1102, %v1113
      %v1115 = vld [vmem:[%s6] sm:$0xff]
      %v1116 = vld [vmem:[%s6 + $0x8] sm:$0xff]
      %v1117 = vld [vmem:[%s6 + $0x10] sm:$0xff]
      %v1118 = vld [vmem:[%s6 + $0x18] sm:$0xff]
      %v1119 = vld [vmem:[%s7] sm:$0x1]
      %v1121 = vsel %vm331, %v1114, 0
      %1123 = vmatprep.subr.mxu0 0.0
      %1124 = vmatpush1.msra.mxu0 %v1115
      %1125 = vmatprep.subr.mxu0 0.0
      %1126 = vmatpush1.msra.mxu0 %v1116
      %1127 = vmatprep.subr.mxu0 0.0
      %1128 = vmatpush1.msra.mxu0 %v1117
      %1129 = vmatprep.subr.mxu0 0.0
      %1130 = vmatpush1.msra.mxu0 %v1118
      %1131 = vmatprep.subr.mxu0 0.0
      %1132 = vmatpush1.msra.mxu0 0.0
      %1133 = vmatprep.subr.mxu0 0.0
      %1134 = vmatpush1.msra.mxu0 0.0
      %1135 = vmatprep.subr.mxu0 0.0
      %1136 = vmatpush1.msra.mxu0 0.0
      %1137 = vmatprep.subr.mxu0 0.0
      %1138 = vmatpush1.msra.mxu0 0.0
      %1139 = vmatprep.subr.mxu0 0.0
      %1140 = vmatpush1.msra.mxu0 0.0
      %1141 = vmatprep.subr.mxu0 0.0
      %1142 = vmatpush1.msra.mxu0 0.0
      %1143 = vmatprep.subr.mxu0 0.0
      %1144 = vmatpush1.msra.mxu0 0.0
      %1145 = vmatprep.subr.mxu0 0.0
      %1146 = vmatpush1.msra.mxu0 0.0
      %1147 = vmatprep.subr.mxu0 0.0
      %1148 = vmatpush1.msra.mxu0 0.0
      %1149 = vmatprep.subr.mxu0 0.0
      %1150 = vmatpush1.msra.mxu0 0.0
      %1151 = vmatprep.subr.mxu0 0.0
      %1152 = vmatpush1.msra.mxu0 0.0
      %1153 = vmatprep.subr.mxu0 0.0
      %1154 = vmatpush1.msra.mxu0 0.0
      %1155 = vmatprep.subr.mxu0 0.0
      %1156 = vmatpush1.msra.mxu0 0.0
      %1157 = vmatprep.subr.mxu0 0.0
      %1158 = vmatpush1.msra.mxu0 0.0
      %1159 = vmatprep.subr.mxu0 0.0
      %1160 = vmatpush1.msra.mxu0 0.0
      %1161 = vmatprep.subr.mxu0 0.0
      %1162 = vmatpush1.msra.mxu0 0.0
      %1163 = vmatprep.subr.mxu0 0.0
      %1164 = vmatpush1.msra.mxu0 0.0
      %1165 = vmatprep.subr.mxu0 0.0
      %1166 = vmatpush1.msra.mxu0 0.0
      %1167 = vmatprep.subr.mxu0 0.0
      %1168 = vmatpush1.msra.mxu0 0.0
      %1169 = vmatprep.subr.mxu0 0.0
      %1170 = vmatpush1.msra.mxu0 0.0
      %1171 = vmatprep.subr.mxu0 0.0
      %1172 = vmatpush1.msra.mxu0 0.0
      %1173 = vmatprep.subr.mxu0 0.0
      %1174 = vmatpush1.msra.mxu0 0.0
      %1175 = vmatprep.subr.mxu0 0.0
      %1176 = vmatpush1.msra.mxu0 0.0
      %1177 = vmatprep.subr.mxu0 0.0
      %1178 = vmatpush1.msra.mxu0 0.0
      %1179 = vmatprep.subr.mxu0 0.0
      %1180 = vmatpush1.msra.mxu0 0.0
      %1181 = vmatprep.subr.mxu0 0.0
      %1182 = vmatpush1.msra.mxu0 0.0
      %1183 = vmatprep.subr.mxu0 0.0
      %1184 = vmatpush1.msra.mxu0 0.0
      %1185 = vmatprep.subr.mxu0 0.0
      %1186 = vmatpush1.msra.mxu0 0.0
      %1187 = vmatprep.mubr.f32.mxu0 0.0
      %1188 = vmatmul.mubr.f32.gmra.mrb[0].mxu0 %v1121
      %v1189 = vpop.f32.mrb[0].mxu0
      %v1190 = vadd.f32 %v1119, %v1189
      %v1191 = vpop.f32.mrb[0].mxu0
      %1192 = vdwg.mxu0
      %v1193 = vtanh.pop %v1190
      %v1194 = vld [vmem:[%s8] sm:$0xff]
      %v1195 = vld [vmem:[%s8 + $0x8] sm:$0xff]
      %v1196 = vld [vmem:[%s8 + $0x10] sm:$0xff]
      %v1197 = vld [vmem:[%s8 + $0x18] sm:$0xff]
      %v1198 = vld [vmem:[%s9] sm:$0x1]
      %v1200 = vsel %vm331, %v1193, 0
      %1202 = vmatprep.subr.mxu0 0.0
      %1203 = vmatpush1.msra.mxu0 %v1194
      %1204 = vmatprep.subr.mxu0 0.0
      %1205 = vmatpush1.msra.mxu0 %v1195
      %1206 = vmatprep.subr.mxu0 0.0
      %1207 = vmatpush1.msra.mxu0 %v1196
      %1208 = vmatprep.subr.mxu0 0.0
      %1209 = vmatpush1.msra.mxu0 %v1197
      %1210 = vmatprep.subr.mxu0 0.0
      %1211 = vmatpush1.msra.mxu0 0.0
      %1212 = vmatprep.subr.mxu0 0.0
      %1213 = vmatpush1.msra.mxu0 0.0
      %1214 = vmatprep.subr.mxu0 0.0
      %1215 = vmatpush1.msra.mxu0 0.0
      %1216 = vmatprep.subr.mxu0 0.0
      %1217 = vmatpush1.msra.mxu0 0.0
      %1218 = vmatprep.subr.mxu0 0.0
      %1219 = vmatpush1.msra.mxu0 0.0
      %1220 = vmatprep.subr.mxu0 0.0
      %1221 = vmatpush1.msra.mxu0 0.0
      %1222 = vmatprep.subr.mxu0 0.0
      %1223 = vmatpush1.msra.mxu0 0.0
      %1224 = vmatprep.subr.mxu0 0.0
      %1225 = vmatpush1.msra.mxu0 0.0
      %1226 = vmatprep.subr.mxu0 0.0
      %1227 = vmatpush1.msra.mxu0 0.0
      %1228 = vmatprep.subr.mxu0 0.0
      %1229 = vmatpush1.msra.mxu0 0.0
      %1230 = vmatprep.subr.mxu0 0.0
      %1231 = vmatpush1.msra.mxu0 0.0
      %1232 = vmatprep.subr.mxu0 0.0
      %1233 = vmatpush1.msra.mxu0 0.0
      %1234 = vmatprep.subr.mxu0 0.0
      %1235 = vmatpush1.msra.mxu0 0.0
      %1236 = vmatprep.subr.mxu0 0.0
      %1237 = vmatpush1.msra.mxu0 0.0
      %1238 = vmatprep.subr.mxu0 0.0
      %1239 = vmatpush1.msra.mxu0 0.0
      %1240 = vmatprep.subr.mxu0 0.0
      %1241 = vmatpush1.msra.mxu0 0.0
      %1242 = vmatprep.subr.mxu0 0.0
      %1243 = vmatpush1.msra.mxu0 0.0
      %1244 = vmatprep.subr.mxu0 0.0
      %1245 = vmatpush1.msra.mxu0 0.0
      %1246 = vmatprep.subr.mxu0 0.0
      %1247 = vmatpush1.msra.mxu0 0.0
      %1248 = vmatprep.subr.mxu0 0.0
      %1249 = vmatpush1.msra.mxu0 0.0
      %1250 = vmatprep.subr.mxu0 0.0
      %1251 = vmatpush1.msra.mxu0 0.0
      %1252 = vmatprep.subr.mxu0 0.0
      %1253 = vmatpush1.msra.mxu0 0.0
      %1254 = vmatprep.subr.mxu0 0.0
      %1255 = vmatpush1.msra.mxu0 0.0
      %1256 = vmatprep.subr.mxu0 0.0
      %1257 = vmatpush1.msra.mxu0 0.0
      %1258 = vmatprep.subr.mxu0 0.0
      %1259 = vmatpush1.msra.mxu0 0.0
      %1260 = vmatprep.subr.mxu0 0.0
      %1261 = vmatpush1.msra.mxu0 0.0
      %1262 = vmatprep.subr.mxu0 0.0
      %1263 = vmatpush1.msra.mxu0 0.0
      %1264 = vmatprep.subr.mxu0 0.0
      %1265 = vmatpush1.msra.mxu0 0.0
      %1266 = vmatprep.mubr.f32.mxu0 0.0
      %1267 = vmatmul.mubr.f32.gmra.mrb[0].mxu0 %v1200
      %v1268 = vpop.f32.mrb[0].mxu0
      %v1269 = vadd.f32 %v1198, %v1268
      %v1270 = vpop.f32.mrb[0].mxu0
      %1271 = vdwg.mxu0
      %1272 = vst.msk [vmem:[#allocation6] sm:$0x1] %vm1096, %v1269
    $region65: #{tpu_custom_call.1} parent=1 // pred_fallthru
      _
    // Predicated region
    $region66: #{tpu_custom_call.1} parent=1 // pred_check
      _
    $region67: #{tpu_custom_call.1} parent=1 // pred_check_branch
      %1274 = sbr.rel (0) target = $region69
    $region68: #{tpu_custom_call.1} parent=1 // pred_region
      %s1276 = ssub.s32 16, 16
      %1277 = vsyncadd [#allocation7], %s1276
      %s1279 = sshll.u32 [#allocation6], 4
      %s1280 = int_to_ptr.vmem [resolvable:$true] %s1279
      %1282 = dma.vmem_to_hbm [thread:$0]  %s1280, 16, %s14, [#allocation7]
    $region69: #{tpu_custom_call.1} parent=1 // pred_fallthru
      _
    // Predicated region
    $region70: #{tpu_custom_call.1} parent=1 // pred_check
      _
    $region71: #{tpu_custom_call.1} parent=1 // pred_check_branch
      %1284 = sbr.rel (0) target = $region73
    $region72: #{tpu_custom_call.1} parent=1 // pred_region
      %s1286 = ssub.s32 16, 16
      %1287 = vsyncadd [#allocation9], %s1286
      %s1289 = sshll.u32 [#allocation8], 4
      %s1290 = int_to_ptr.vmem [resolvable:$true] %s1289
      %1292 = dma.vmem_to_hbm [thread:$0]  %s1290, 16, %s15, [#allocation9]
    $region73: #{tpu_custom_call.1} parent=1 // pred_fallthru
      _
    // Predicated region
    $region74: #{tpu_custom_call.1} parent=1 // pred_check
      _
    $region75: #{tpu_custom_call.1} parent=1 // pred_check_branch
      %1294 = sbr.rel (0) target = $region77
    $region76: #{tpu_custom_call.1} parent=1 // pred_region
      %1295 = dma.done [#allocation7], 16
    $region77: #{tpu_custom_call.1} parent=1 // pred_fallthru
      _
    // Predicated region
    $region78: #{tpu_custom_call.1} parent=1 // pred_check
      _
    $region79: #{tpu_custom_call.1} parent=1 // pred_check_branch
      %1297 = sbr.rel (0) target = $region81
    $region80: #{tpu_custom_call.1} parent=1 // pred_region
      %1298 = dma.done [#allocation9], 16
    $region81: #{tpu_custom_call.1} parent=1 // pred_fallthru
      _
    %1299 = vsyncpa [#allocation7], 1
    %1300 = vsyncpa [#allocation9], 1

</llo_original>
